<compile_context>
chip_gen: v5e
topology: v5e:2x2
jax: 0.10.0
libtpu: 0.0.40
codegen_flags: <defaults>
</compile_context>

<pallas_src>
import math
from functools import partial

import jax
import jax.numpy as jnp
from jax.experimental import pallas as pl
from jax.experimental.pallas import tpu as pltpu

_K_PAD = 8  # zero-pad LSTM input features 3 -> 8 (sublane granule)


# -----------------------------------------------------------------------------
# Fused kernel: LSTM recurrence + adapter + MDN heads.
#   x_ref      : (S*Bp, Kp)  bf16   time-major, batch padded to Bp, K padded
#   wih_ref    : (Kp, 4H)    bf16   input->gates weight (transposed, order i,f,o,g)
#   b_ref      : (1, 4H)     f32    b_ih + b_hh folded, reordered
#   whh_ref    : (H, 4H)     bf16   hidden->gates weight (transposed, reordered)
#   h0_ref     : (Bp, H)     f32    initial hidden state
#   c0_ref     : (Bp, H)     f32    initial cell state
#   wa_ref     : (H, H)      bf16   adapter weight (transposed)
#   ba_ref     : (1, H)      f32
#   whead_ref  : (H, HP)     bf16   [pos_pi | pos_sigma | pos_mu | end_pi | end_probs | 0-pad]
#   bhead_ref  : (1, HP)     f32
# Outputs: h_n (Bp,H), c_n (Bp,H), heads (Bp, HP) post-activation (lane-dense).
# Scratch: xp_scr (S*Bp, 4H) f32 — hoisted input projection.
# -----------------------------------------------------------------------------
def writer_kernel(n, x_ref, wih_ref, b_ref, whh_ref, h0_ref, c0_ref,
                  wa_ref, ba_ref, whead_ref, bhead_ref,
                  h_out, c_out, head_out, xp_scr):
    Bp, H = h_out.shape
    S = x_ref.shape[0] // Bp

    # Input projection hoisted out of the recurrence; parked in VMEM scratch so
    # only one (Bp, 4H) slice is live per step.
    xp_scr[...] = (jnp.dot(x_ref[...], wih_ref[...],
                           preferred_element_type=jnp.float32) + b_ref[...])

    h = h0_ref[...]
    c = c0_ref[...]

    # Fully unrolled recurrence (S small & static). Gate column order: i,f,o,g.
    for t in range(S):
        gates = xp_scr[t * Bp:(t + 1) * Bp, :] + jnp.dot(
            h.astype(whh_ref.dtype), whh_ref[...],
            preferred_element_type=jnp.float32)
        sig = jax.nn.sigmoid(gates[:, 0:3 * H])        # i | f | o  (single EUP pass)
        g = jnp.tanh(gates[:, 3 * H:4 * H])
        i = sig[:, 0:H]
        f = sig[:, H:2 * H]
        o = sig[:, 2 * H:3 * H]
        c = f * c + i * g
        h = o * jnp.tanh(c)

    # Final hidden / cell state written once (not per step).
    h_out[...] = h
    c_out[...] = c

    # adapter + ReLU
    a = jnp.maximum(
        jnp.dot(h.astype(wa_ref.dtype), wa_ref[...],
                preferred_element_type=jnp.float32) + ba_ref[...], 0.0)

    # Fused MDN heads: one (Bp,H)@(H,HP) lane-dense matmul; per-segment
    # activations via lane-index masks; single full-width store.
    z = (jnp.dot(a.astype(whead_ref.dtype), whead_ref[...],
                 preferred_element_type=jnp.float32) + bhead_ref[...])

    lane = jax.lax.broadcasted_iota(jnp.int32, z.shape, 1)
    pos_pi_m = lane < n
    sigma_m = (lane >= n) & (lane < 3 * n)
    end_pi_m = (lane >= 5 * n) & (lane < 6 * n)
    probs_m = (lane >= 6 * n) & (lane < 7 * n)
    valid_m = lane < 7 * n

    def seg_softmax(mask):
        zm = jnp.where(mask, z, -jnp.inf)
        m = jnp.max(zm, axis=-1, keepdims=True)
        e = jnp.where(mask, jnp.exp(z - m), 0.0)
        s = jnp.sum(e, axis=-1, keepdims=True)
        return e / s                                    # exact divide for parity

    sm_pos = seg_softmax(pos_pi_m)
    sm_end = seg_softmax(end_pi_m)

    out = jnp.where(sigma_m, jnp.exp(z), z)             # sigma = exp, mu = identity
    out = jnp.where(probs_m, z + 1e-06, out)            # bernoulli probs + eps
    out = jnp.where(pos_pi_m, sm_pos, out)
    out = jnp.where(end_pi_m, sm_end, out)
    head_out[...] = jnp.where(valid_m, out, 0.0)


# -----------------------------------------------------------------------------
# Parameter init (deterministic, PyTorch-style uniform(-1/sqrt(fan_in), ..)).
# Weights stored pre-transposed as (fan_in, fan_out).
# -----------------------------------------------------------------------------
def _linear(key, fan_in, fan_out):
    kw, kb = jax.random.split(key)
    bound = 1.0 / math.sqrt(fan_in)
    w = jax.random.uniform(kw, (fan_in, fan_out), jnp.float32, -bound, bound)
    b = jax.random.uniform(kb, (1, fan_out), jnp.float32, -bound, bound)
    return w, b


def init_params(key, hidden_dim, n_dist):
    keys = jax.random.split(key, 9)
    H = hidden_dim
    bound = 1.0 / math.sqrt(H)
    p = {}
    p["lstm_wih_t"] = jax.random.uniform(keys[0], (3, 4 * H), jnp.float32, -bound, bound)
    p["lstm_whh_t"] = jax.random.uniform(keys[1], (H, 4 * H), jnp.float32, -bound, bound)
    p["lstm_b_ih"] = jax.random.uniform(keys[2], (1, 4 * H), jnp.float32, -bound, bound)
    p["lstm_b_hh"] = jax.random.uniform(keys[3], (1, 4 * H), jnp.float32, -bound, bound)
    p["adapter_w"], p["adapter_b"] = _linear(keys[4], H, H)
    p["pos_pi_w"], p["pos_pi_b"] = _linear(keys[5], H, n_dist)
    p["pos_sigma_w"], p["pos_sigma_b"] = _linear(keys[6], H, 2 * n_dist)
    p["pos_mu_w"], p["pos_mu_b"] = _linear(keys[7], H, 2 * n_dist)
    k8a, k8b = jax.random.split(keys[8])
    p["end_pi_w"], p["end_pi_b"] = _linear(k8a, H, n_dist)
    p["end_probs_w"], p["end_probs_b"] = _linear(k8b, H, n_dist)  # out_dim(1) * n_dist
    return p


# -----------------------------------------------------------------------------
# One-time packing (run at init, NOT per call): gate reorder i,f,g,o -> i,f,o,g,
# bias folding, head fusion + lane padding, bf16 casts, input-K padding.
# -----------------------------------------------------------------------------
def pack_params(params):
    H = params["lstm_whh_t"].shape[0]

    def reorder_gates(w):  # columns [i|f|g|o] -> [i|f|o|g]
        return jnp.concatenate(
            [w[..., 0:H], w[..., H:2 * H], w[..., 3 * H:4 * H], w[..., 2 * H:3 * H]],
            axis=-1)

    wih = reorder_gates(params["lstm_wih_t"])
    wih = jnp.pad(wih, ((0, _K_PAD - wih.shape[0]), (0, 0)))
    whh = reorder_gates(params["lstm_whh_t"])
    b = reorder_gates(params["lstm_b_ih"] + params["lstm_b_hh"])

    whead = jnp.concatenate(
        [params["pos_pi_w"], params["pos_sigma_w"], params["pos_mu_w"],
         params["end_pi_w"], params["end_probs_w"]], axis=1)
    bhead = jnp.concatenate(
        [params["pos_pi_b"], params["pos_sigma_b"], params["pos_mu_b"],
         params["end_pi_b"], params["end_probs_b"]], axis=1)
    hp = max(128, ((whead.shape[1] + 127) // 128) * 128)  # lane-dense head width
    whead = jnp.pad(whead, ((0, 0), (0, hp - whead.shape[1])))
    bhead = jnp.pad(bhead, ((0, 0), (0, hp - bhead.shape[1])))

    wdt = jnp.bfloat16  # MXU-native operand dtype; accumulation stays f32
    return {
        "wih": wih.astype(wdt),                 # (Kp, 4H)
        "whh": whh.astype(wdt),                 # (H, 4H)
        "b": b,                                 # (1, 4H) f32
        "wa": params["adapter_w"].astype(wdt),  # (H, H)
        "ba": params["adapter_b"],              # (1, H) f32
        "whead": whead.astype(wdt),             # (H, HP)
        "bhead": bhead,                         # (1, HP) f32
    }


# -----------------------------------------------------------------------------
# WRITER forward. x: (B, S, 3) float32, batch-first.
# Returns ((pi, sigma, mu), (pi_end, probs), (h_n, c_n)).
# -----------------------------------------------------------------------------
def writer_forward(x, packed, n_dist, hidden_states=None):
    B, S, _ = x.shape
    H = packed["whh"].shape[0]
    Kp = packed["wih"].shape[0]
    HP = packed["whead"].shape[1]
    n = n_dist
    Bp = max(8, ((B + 7) // 8) * 8)  # pad batch to the 8-sublane granule

    # time-major, pad batch to Bp and features to Kp, flatten, bf16 for the MXU
    x_tm = jnp.transpose(x, (1, 0, 2))
    x_tm = jnp.pad(x_tm, ((0, 0), (0, Bp - B), (0, Kp - x.shape[2])))
    x_flat = x_tm.reshape(S * Bp, Kp).astype(jnp.bfloat16)

    if hidden_states is None:
        h0 = jnp.zeros((Bp, H), jnp.float32)
        c0 = jnp.zeros((Bp, H), jnp.float32)
    else:
        h0 = jnp.pad(hidden_states[0][0].astype(jnp.float32), ((0, Bp - B), (0, 0)))
        c0 = jnp.pad(hidden_states[1][0].astype(jnp.float32), ((0, Bp - B), (0, 0)))

    h_pad, c_pad, head_pad = pl.pallas_call(
        partial(writer_kernel, n),
        out_shape=(
            jax.ShapeDtypeStruct((Bp, H), jnp.float32),    # h_n (padded)
            jax.ShapeDtypeStruct((Bp, H), jnp.float32),    # c_n (padded)
            jax.ShapeDtypeStruct((Bp, HP), jnp.float32),   # fused heads (lane-dense)
        ),
        scratch_shapes=[pltpu.VMEM((S * Bp, 4 * H), jnp.float32)],
    )(x_flat, packed["wih"], packed["b"], packed["whh"], h0, c0,
      packed["wa"], packed["ba"], packed["whead"], packed["bhead"])

    # Slice padded rows/lanes off and split the fused head output.
    h_n = h_pad[:B]
    c_n = c_pad[:B]
    z = head_pad[:B]
    pi_pos = z[:, 0:n]
    sigma = z[:, n:3 * n].reshape(B, n, 2)
    mu = z[:, 3 * n:5 * n].reshape(B, n, 2)
    pi_end = z[:, 5 * n:6 * n]
    probs = z[:, 6 * n:7 * n].reshape(B, n, 1)

    hidden_out = (h_n[None, :, :], c_n[None, :, :])  # (1, B, H) each
    return (pi_pos, sigma, mu), (pi_end, probs), hidden_out


if __name__ == "__main__":
    B, S, HIDDEN, N_DIST = 2, 8, 128, 8

    key = jax.random.PRNGKey(0)
    kx, kp = jax.random.split(key)
    x = jax.random.normal(kx, (B, S, 3), dtype=jnp.float32)
    params = init_params(kp, HIDDEN, N_DIST)
    packed = pack_params(params)  # one-time weight packing, off the per-call path

    fwd = jax.jit(writer_forward, static_argnums=(2,))
    pos, end, hidden_states = fwd(x, packed, N_DIST)
    jax.block_until_ready((pos, end, hidden_states))

    pi_pos, sigma, mu = pos
    pi_end, probs = end
    assert pi_pos.shape == (B, N_DIST)
    assert sigma.shape == (B, N_DIST, 2)
    assert mu.shape == (B, N_DIST, 2)
    assert pi_end.shape == (B, N_DIST)
    assert probs.shape == (B, N_DIST, 1)
    assert hidden_states[0].shape == (1, B, HIDDEN)
    assert hidden_states[1].shape == (1, B, HIDDEN)
    # softmax outputs must sum to 1; sigma must be positive (exp)
    assert bool(jnp.all(jnp.abs(jnp.sum(pi_pos, axis=-1) - 1.0) < 1e-3))
    assert bool(jnp.all(jnp.abs(jnp.sum(pi_end, axis=-1) - 1.0) < 1e-3))
    assert bool(jnp.all(sigma > 0.0))
    assert bool(jnp.all(jnp.isfinite(mu)))

    print("KERNEL_OK")
</pallas_src>

<mosaic_0001>
module attributes {stable_mosaic.version = 11 : i64} {
  func.func @writer_kernel(%arg0: memref<64x8xbf16, #tpu.memory_space<vmem>>, %arg1: memref<8x512xbf16, #tpu.memory_space<vmem>>, %arg2: memref<1x512xf32, #tpu.memory_space<vmem>>, %arg3: memref<128x512xbf16, #tpu.memory_space<vmem>>, %arg4: memref<8x128xf32, #tpu.memory_space<vmem>>, %arg5: memref<8x128xf32, #tpu.memory_space<vmem>>, %arg6: memref<128x128xbf16, #tpu.memory_space<vmem>>, %arg7: memref<1x128xf32, #tpu.memory_space<vmem>>, %arg8: memref<128x128xbf16, #tpu.memory_space<vmem>>, %arg9: memref<1x128xf32, #tpu.memory_space<vmem>>, %arg10: memref<8x128xf32, #tpu.memory_space<vmem>>, %arg11: memref<8x128xf32, #tpu.memory_space<vmem>>, %arg12: memref<8x128xf32, #tpu.memory_space<vmem>>, %arg13: memref<64x512xf32, #tpu.memory_space<vmem>>) attributes {dimension_semantics = [], scalar_prefetch = 0 : i64, scratch_operands = 1 : i64, tpu.core_type = #tpu.core_type<tc>} {
    %c0 = arith.constant 0 : index
    %c0_0 = arith.constant 0 : index
    %0 = vector.load %arg0[%c0, %c0_0] : memref<64x8xbf16, #tpu.memory_space<vmem>>, vector<64x8xbf16>
    %c0_1 = arith.constant 0 : index
    %c0_2 = arith.constant 0 : index
    %1 = vector.load %arg1[%c0_1, %c0_2] : memref<8x512xbf16, #tpu.memory_space<vmem>>, vector<8x512xbf16>
    %cst = arith.constant dense<0.000000e+00> : vector<64x512xf32>
    %2 = tpu.matmul %0, %1, %cst {dimension_numbers = #tpu.dot_dimension_numbers<[1], [0], [0], [1], [0, 0, 1, 1], [], []>} : vector<64x8xbf16>, vector<8x512xbf16>, vector<64x512xf32> -> vector<64x512xf32>
    %c0_3 = arith.constant 0 : index
    %c0_4 = arith.constant 0 : index
    %3 = vector.load %arg2[%c0_3, %c0_4] : memref<1x512xf32, #tpu.memory_space<vmem>>, vector<1x512xf32>
    %4 = vector.broadcast %3 : vector<1x512xf32> to vector<64x512xf32>
    %5 = arith.addf %2, %4 : vector<64x512xf32>
    %c0_5 = arith.constant 0 : index
    %c0_6 = arith.constant 0 : index
    %6 = vector.load %arg13[%c0_5, %c0_6] : memref<64x512xf32, #tpu.memory_space<vmem>>, vector<64x512xf32>
    tpu.vector_store %arg13[%c0_5, %c0_6], %5 {strides = array<i32>} : memref<64x512xf32, #tpu.memory_space<vmem>>, vector<64x512xf32>,
    %c0_7 = arith.constant 0 : index
    %c0_8 = arith.constant 0 : index
    %7 = vector.load %arg4[%c0_7, %c0_8] : memref<8x128xf32, #tpu.memory_space<vmem>>, vector<8x128xf32>
    %c0_9 = arith.constant 0 : index
    %c0_10 = arith.constant 0 : index
    %8 = vector.load %arg5[%c0_9, %c0_10] : memref<8x128xf32, #tpu.memory_space<vmem>>, vector<8x128xf32>
    %c0_11 = arith.constant 0 : index
    %c0_12 = arith.constant 0 : index
    %9 = vector.load %arg13[%c0_11, %c0_12] : memref<64x512xf32, #tpu.memory_space<vmem>>, vector<8x512xf32>
    %10 = arith.truncf %7 : vector<8x128xf32> to vector<8x128xbf16>
    %c0_13 = arith.constant 0 : index
    %c0_14 = arith.constant 0 : index
    %11 = vector.load %arg3[%c0_13, %c0_14] : memref<128x512xbf16, #tpu.memory_space<vmem>>, vector<128x512xbf16>
    %cst_15 = arith.constant dense<0.000000e+00> : vector<8x512xf32>
    %12 = tpu.matmul %10, %11, %cst_15 {dimension_numbers = #tpu.dot_dimension_numbers<[1], [0], [0], [1], [0, 0, 1, 1], [], []>} : vector<8x128xbf16>, vector<128x512xbf16>, vector<8x512xf32> -> vector<8x512xf32>
    %13 = arith.addf %9, %12 : vector<8x512xf32>
    %14 = vector.extract_strided_slice %13 {offsets = [0, 0], sizes = [8, 384], strides = [1, 1]} : vector<8x512xf32> to vector<8x384xf32>
    %15 = arith.negf %14 : vector<8x384xf32>
    %16 = math.exp %15 : vector<8x384xf32>
    %cst_16 = arith.constant 1.000000e+00 : f32
    %17 = vector.broadcast %cst_16 : f32 to vector<8x384xf32>
    %18 = arith.addf %17, %16 : vector<8x384xf32>
    %19 = arith.divf %17, %18 : vector<8x384xf32>
    %20 = vector.extract_strided_slice %13 {offsets = [0, 384], sizes = [8, 128], strides = [1, 1]} : vector<8x512xf32> to vector<8x128xf32>
    %21 = math.tanh %20 : vector<8x128xf32>
    %22 = vector.extract_strided_slice %19 {offsets = [0, 0], sizes = [8, 128], strides = [1, 1]} : vector<8x384xf32> to vector<8x128xf32>
    %23 = vector.extract_strided_slice %19 {offsets = [0, 128], sizes = [8, 128], strides = [1, 1]} : vector<8x384xf32> to vector<8x128xf32>
    %24 = vector.extract_strided_slice %19 {offsets = [0, 256], sizes = [8, 128], strides = [1, 1]} : vector<8x384xf32> to vector<8x128xf32>
    %25 = arith.mulf %23, %8 : vector<8x128xf32>
    %26 = arith.mulf %22, %21 : vector<8x128xf32>
    %27 = arith.addf %25, %26 : vector<8x128xf32>
    %28 = math.tanh %27 : vector<8x128xf32>
    %29 = arith.mulf %24, %28 : vector<8x128xf32>
    %c8 = arith.constant 8 : index
    %c0_17 = arith.constant 0 : index
    %30 = vector.load %arg13[%c8, %c0_17] : memref<64x512xf32, #tpu.memory_space<vmem>>, vector<8x512xf32>
    %31 = arith.truncf %29 : vector<8x128xf32> to vector<8x128xbf16>
    %c0_18 = arith.constant 0 : index
    %c0_19 = arith.constant 0 : index
    %32 = vector.load %arg3[%c0_18, %c0_19] : memref<128x512xbf16, #tpu.memory_space<vmem>>, vector<128x512xbf16>
    %cst_20 = arith.constant dense<0.000000e+00> : vector<8x512xf32>
    %33 = tpu.matmul %31, %32, %cst_20 {dimension_numbers = #tpu.dot_dimension_numbers<[1], [0], [0], [1], [0, 0, 1, 1], [], []>} : vector<8x128xbf16>, vector<128x512xbf16>, vector<8x512xf32> -> vector<8x512xf32>
    %34 = arith.addf %30, %33 : vector<8x512xf32>
    %35 = vector.extract_strided_slice %34 {offsets = [0, 0], sizes = [8, 384], strides = [1, 1]} : vector<8x512xf32> to vector<8x384xf32>
    %36 = arith.negf %35 : vector<8x384xf32>
    %37 = math.exp %36 : vector<8x384xf32>
    %cst_21 = arith.constant 1.000000e+00 : f32
    %38 = vector.broadcast %cst_21 : f32 to vector<8x384xf32>
    %39 = arith.addf %38, %37 : vector<8x384xf32>
    %40 = arith.divf %38, %39 : vector<8x384xf32>
    %41 = vector.extract_strided_slice %34 {offsets = [0, 384], sizes = [8, 128], strides = [1, 1]} : vector<8x512xf32> to vector<8x128xf32>
    %42 = math.tanh %41 : vector<8x128xf32>
    %43 = vector.extract_strided_slice %40 {offsets = [0, 0], sizes = [8, 128], strides = [1, 1]} : vector<8x384xf32> to vector<8x128xf32>
    %44 = vector.extract_strided_slice %40 {offsets = [0, 128], sizes = [8, 128], strides = [1, 1]} : vector<8x384xf32> to vector<8x128xf32>
    %45 = vector.extract_strided_slice %40 {offsets = [0, 256], sizes = [8, 128], strides = [1, 1]} : vector<8x384xf32> to vector<8x128xf32>
    %46 = arith.mulf %44, %27 : vector<8x128xf32>
    %47 = arith.mulf %43, %42 : vector<8x128xf32>
    %48 = arith.addf %46, %47 : vector<8x128xf32>
    %49 = math.tanh %48 : vector<8x128xf32>
    %50 = arith.mulf %45, %49 : vector<8x128xf32>
    %c16 = arith.constant 16 : index
    %c0_22 = arith.constant 0 : index
    %51 = vector.load %arg13[%c16, %c0_22] : memref<64x512xf32, #tpu.memory_space<vmem>>, vector<8x512xf32>
    %52 = arith.truncf %50 : vector<8x128xf32> to vector<8x128xbf16>
    %c0_23 = arith.constant 0 : index
    %c0_24 = arith.constant 0 : index
    %53 = vector.load %arg3[%c0_23, %c0_24] : memref<128x512xbf16, #tpu.memory_space<vmem>>, vector<128x512xbf16>
    %cst_25 = arith.constant dense<0.000000e+00> : vector<8x512xf32>
    %54 = tpu.matmul %52, %53, %cst_25 {dimension_numbers = #tpu.dot_dimension_numbers<[1], [0], [0], [1], [0, 0, 1, 1], [], []>} : vector<8x128xbf16>, vector<128x512xbf16>, vector<8x512xf32> -> vector<8x512xf32>
    %55 = arith.addf %51, %54 : vector<8x512xf32>
    %56 = vector.extract_strided_slice %55 {offsets = [0, 0], sizes = [8, 384], strides = [1, 1]} : vector<8x512xf32> to vector<8x384xf32>
    %57 = arith.negf %56 : vector<8x384xf32>
    %58 = math.exp %57 : vector<8x384xf32>
    %cst_26 = arith.constant 1.000000e+00 : f32
    %59 = vector.broadcast %cst_26 : f32 to vector<8x384xf32>
    %60 = arith.addf %59, %58 : vector<8x384xf32>
    %61 = arith.divf %59, %60 : vector<8x384xf32>
    %62 = vector.extract_strided_slice %55 {offsets = [0, 384], sizes = [8, 128], strides = [1, 1]} : vector<8x512xf32> to vector<8x128xf32>
    %63 = math.tanh %62 : vector<8x128xf32>
    %64 = vector.extract_strided_slice %61 {offsets = [0, 0], sizes = [8, 128], strides = [1, 1]} : vector<8x384xf32> to vector<8x128xf32>
    %65 = vector.extract_strided_slice %61 {offsets = [0, 128], sizes = [8, 128], strides = [1, 1]} : vector<8x384xf32> to vector<8x128xf32>
    %66 = vector.extract_strided_slice %61 {offsets = [0, 256], sizes = [8, 128], strides = [1, 1]} : vector<8x384xf32> to vector<8x128xf32>
    %67 = arith.mulf %65, %48 : vector<8x128xf32>
    %68 = arith.mulf %64, %63 : vector<8x128xf32>
    %69 = arith.addf %67, %68 : vector<8x128xf32>
    %70 = math.tanh %69 : vector<8x128xf32>
    %71 = arith.mulf %66, %70 : vector<8x128xf32>
    %c24 = arith.constant 24 : index
    %c0_27 = arith.constant 0 : index
    %72 = vector.load %arg13[%c24, %c0_27] : memref<64x512xf32, #tpu.memory_space<vmem>>, vector<8x512xf32>
    %73 = arith.truncf %71 : vector<8x128xf32> to vector<8x128xbf16>
    %c0_28 = arith.constant 0 : index
    %c0_29 = arith.constant 0 : index
    %74 = vector.load %arg3[%c0_28, %c0_29] : memref<128x512xbf16, #tpu.memory_space<vmem>>, vector<128x512xbf16>
    %cst_30 = arith.constant dense<0.000000e+00> : vector<8x512xf32>
    %75 = tpu.matmul %73, %74, %cst_30 {dimension_numbers = #tpu.dot_dimension_numbers<[1], [0], [0], [1], [0, 0, 1, 1], [], []>} : vector<8x128xbf16>, vector<128x512xbf16>, vector<8x512xf32> -> vector<8x512xf32>
    %76 = arith.addf %72, %75 : vector<8x512xf32>
    %77 = vector.extract_strided_slice %76 {offsets = [0, 0], sizes = [8, 384], strides = [1, 1]} : vector<8x512xf32> to vector<8x384xf32>
    %78 = arith.negf %77 : vector<8x384xf32>
    %79 = math.exp %78 : vector<8x384xf32>
    %cst_31 = arith.constant 1.000000e+00 : f32
    %80 = vector.broadcast %cst_31 : f32 to vector<8x384xf32>
    %81 = arith.addf %80, %79 : vector<8x384xf32>
    %82 = arith.divf %80, %81 : vector<8x384xf32>
    %83 = vector.extract_strided_slice %76 {offsets = [0, 384], sizes = [8, 128], strides = [1, 1]} : vector<8x512xf32> to vector<8x128xf32>
    %84 = math.tanh %83 : vector<8x128xf32>
    %85 = vector.extract_strided_slice %82 {offsets = [0, 0], sizes = [8, 128], strides = [1, 1]} : vector<8x384xf32> to vector<8x128xf32>
    %86 = vector.extract_strided_slice %82 {offsets = [0, 128], sizes = [8, 128], strides = [1, 1]} : vector<8x384xf32> to vector<8x128xf32>
    %87 = vector.extract_strided_slice %82 {offsets = [0, 256], sizes = [8, 128], strides = [1, 1]} : vector<8x384xf32> to vector<8x128xf32>
    %88 = arith.mulf %86, %69 : vector<8x128xf32>
    %89 = arith.mulf %85, %84 : vector<8x128xf32>
    %90 = arith.addf %88, %89 : vector<8x128xf32>
    %91 = math.tanh %90 : vector<8x128xf32>
    %92 = arith.mulf %87, %91 : vector<8x128xf32>
    %c32 = arith.constant 32 : index
    %c0_32 = arith.constant 0 : index
    %93 = vector.load %arg13[%c32, %c0_32] : memref<64x512xf32, #tpu.memory_space<vmem>>, vector<8x512xf32>
    %94 = arith.truncf %92 : vector<8x128xf32> to vector<8x128xbf16>
    %c0_33 = arith.constant 0 : index
    %c0_34 = arith.constant 0 : index
    %95 = vector.load %arg3[%c0_33, %c0_34] : memref<128x512xbf16, #tpu.memory_space<vmem>>, vector<128x512xbf16>
    %cst_35 = arith.constant dense<0.000000e+00> : vector<8x512xf32>
    %96 = tpu.matmul %94, %95, %cst_35 {dimension_numbers = #tpu.dot_dimension_numbers<[1], [0], [0], [1], [0, 0, 1, 1], [], []>} : vector<8x128xbf16>, vector<128x512xbf16>, vector<8x512xf32> -> vector<8x512xf32>
    %97 = arith.addf %93, %96 : vector<8x512xf32>
    %98 = vector.extract_strided_slice %97 {offsets = [0, 0], sizes = [8, 384], strides = [1, 1]} : vector<8x512xf32> to vector<8x384xf32>
    %99 = arith.negf %98 : vector<8x384xf32>
    %100 = math.exp %99 : vector<8x384xf32>
    %cst_36 = arith.constant 1.000000e+00 : f32
    %101 = vector.broadcast %cst_36 : f32 to vector<8x384xf32>
    %102 = arith.addf %101, %100 : vector<8x384xf32>
    %103 = arith.divf %101, %102 : vector<8x384xf32>
    %104 = vector.extract_strided_slice %97 {offsets = [0, 384], sizes = [8, 128], strides = [1, 1]} : vector<8x512xf32> to vector<8x128xf32>
    %105 = math.tanh %104 : vector<8x128xf32>
    %106 = vector.extract_strided_slice %103 {offsets = [0, 0], sizes = [8, 128], strides = [1, 1]} : vector<8x384xf32> to vector<8x128xf32>
    %107 = vector.extract_strided_slice %103 {offsets = [0, 128], sizes = [8, 128], strides = [1, 1]} : vector<8x384xf32> to vector<8x128xf32>
    %108 = vector.extract_strided_slice %103 {offsets = [0, 256], sizes = [8, 128], strides = [1, 1]} : vector<8x384xf32> to vector<8x128xf32>
    %109 = arith.mulf %107, %90 : vector<8x128xf32>
    %110 = arith.mulf %106, %105 : vector<8x128xf32>
    %111 = arith.addf %109, %110 : vector<8x128xf32>
    %112 = math.tanh %111 : vector<8x128xf32>
    %113 = arith.mulf %108, %112 : vector<8x128xf32>
    %c40 = arith.constant 40 : index
    %c0_37 = arith.constant 0 : index
    %114 = vector.load %arg13[%c40, %c0_37] : memref<64x512xf32, #tpu.memory_space<vmem>>, vector<8x512xf32>
    %115 = arith.truncf %113 : vector<8x128xf32> to vector<8x128xbf16>
    %c0_38 = arith.constant 0 : index
    %c0_39 = arith.constant 0 : index
    %116 = vector.load %arg3[%c0_38, %c0_39] : memref<128x512xbf16, #tpu.memory_space<vmem>>, vector<128x512xbf16>
    %cst_40 = arith.constant dense<0.000000e+00> : vector<8x512xf32>
    %117 = tpu.matmul %115, %116, %cst_40 {dimension_numbers = #tpu.dot_dimension_numbers<[1], [0], [0], [1], [0, 0, 1, 1], [], []>} : vector<8x128xbf16>, vector<128x512xbf16>, vector<8x512xf32> -> vector<8x512xf32>
    %118 = arith.addf %114, %117 : vector<8x512xf32>
    %119 = vector.extract_strided_slice %118 {offsets = [0, 0], sizes = [8, 384], strides = [1, 1]} : vector<8x512xf32> to vector<8x384xf32>
    %120 = arith.negf %119 : vector<8x384xf32>
    %121 = math.exp %120 : vector<8x384xf32>
    %cst_41 = arith.constant 1.000000e+00 : f32
    %122 = vector.broadcast %cst_41 : f32 to vector<8x384xf32>
    %123 = arith.addf %122, %121 : vector<8x384xf32>
    %124 = arith.divf %122, %123 : vector<8x384xf32>
    %125 = vector.extract_strided_slice %118 {offsets = [0, 384], sizes = [8, 128], strides = [1, 1]} : vector<8x512xf32> to vector<8x128xf32>
    %126 = math.tanh %125 : vector<8x128xf32>
    %127 = vector.extract_strided_slice %124 {offsets = [0, 0], sizes = [8, 128], strides = [1, 1]} : vector<8x384xf32> to vector<8x128xf32>
    %128 = vector.extract_strided_slice %124 {offsets = [0, 128], sizes = [8, 128], strides = [1, 1]} : vector<8x384xf32> to vector<8x128xf32>
    %129 = vector.extract_strided_slice %124 {offsets = [0, 256], sizes = [8, 128], strides = [1, 1]} : vector<8x384xf32> to vector<8x128xf32>
    %130 = arith.mulf %128, %111 : vector<8x128xf32>
    %131 = arith.mulf %127, %126 : vector<8x128xf32>
    %132 = arith.addf %130, %131 : vector<8x128xf32>
    %133 = math.tanh %132 : vector<8x128xf32>
    %134 = arith.mulf %129, %133 : vector<8x128xf32>
    %c48 = arith.constant 48 : index
    %c0_42 = arith.constant 0 : index
    %135 = vector.load %arg13[%c48, %c0_42] : memref<64x512xf32, #tpu.memory_space<vmem>>, vector<8x512xf32>
    %136 = arith.truncf %134 : vector<8x128xf32> to vector<8x128xbf16>
    %c0_43 = arith.constant 0 : index
    %c0_44 = arith.constant 0 : index
    %137 = vector.load %arg3[%c0_43, %c0_44] : memref<128x512xbf16, #tpu.memory_space<vmem>>, vector<128x512xbf16>
    %cst_45 = arith.constant dense<0.000000e+00> : vector<8x512xf32>
    %138 = tpu.matmul %136, %137, %cst_45 {dimension_numbers = #tpu.dot_dimension_numbers<[1], [0], [0], [1], [0, 0, 1, 1], [], []>} : vector<8x128xbf16>, vector<128x512xbf16>, vector<8x512xf32> -> vector<8x512xf32>
    %139 = arith.addf %135, %138 : vector<8x512xf32>
    %140 = vector.extract_strided_slice %139 {offsets = [0, 0], sizes = [8, 384], strides = [1, 1]} : vector<8x512xf32> to vector<8x384xf32>
    %141 = arith.negf %140 : vector<8x384xf32>
    %142 = math.exp %141 : vector<8x384xf32>
    %cst_46 = arith.constant 1.000000e+00 : f32
    %143 = vector.broadcast %cst_46 : f32 to vector<8x384xf32>
    %144 = arith.addf %143, %142 : vector<8x384xf32>
    %145 = arith.divf %143, %144 : vector<8x384xf32>
    %146 = vector.extract_strided_slice %139 {offsets = [0, 384], sizes = [8, 128], strides = [1, 1]} : vector<8x512xf32> to vector<8x128xf32>
    %147 = math.tanh %146 : vector<8x128xf32>
    %148 = vector.extract_strided_slice %145 {offsets = [0, 0], sizes = [8, 128], strides = [1, 1]} : vector<8x384xf32> to vector<8x128xf32>
    %149 = vector.extract_strided_slice %145 {offsets = [0, 128], sizes = [8, 128], strides = [1, 1]} : vector<8x384xf32> to vector<8x128xf32>
    %150 = vector.extract_strided_slice %145 {offsets = [0, 256], sizes = [8, 128], strides = [1, 1]} : vector<8x384xf32> to vector<8x128xf32>
    %151 = arith.mulf %149, %132 : vector<8x128xf32>
    %152 = arith.mulf %148, %147 : vector<8x128xf32>
    %153 = arith.addf %151, %152 : vector<8x128xf32>
    %154 = math.tanh %153 : vector<8x128xf32>
    %155 = arith.mulf %150, %154 : vector<8x128xf32>
    %c56 = arith.constant 56 : index
    %c0_47 = arith.constant 0 : index
    %156 = vector.load %arg13[%c56, %c0_47] : memref<64x512xf32, #tpu.memory_space<vmem>>, vector<8x512xf32>
    %157 = arith.truncf %155 : vector<8x128xf32> to vector<8x128xbf16>
    %c0_48 = arith.constant 0 : index
    %c0_49 = arith.constant 0 : index
    %158 = vector.load %arg3[%c0_48, %c0_49] : memref<128x512xbf16, #tpu.memory_space<vmem>>, vector<128x512xbf16>
    %cst_50 = arith.constant dense<0.000000e+00> : vector<8x512xf32>
    %159 = tpu.matmul %157, %158, %cst_50 {dimension_numbers = #tpu.dot_dimension_numbers<[1], [0], [0], [1], [0, 0, 1, 1], [], []>} : vector<8x128xbf16>, vector<128x512xbf16>, vector<8x512xf32> -> vector<8x512xf32>
    %160 = arith.addf %156, %159 : vector<8x512xf32>
    %161 = vector.extract_strided_slice %160 {offsets = [0, 0], sizes = [8, 384], strides = [1, 1]} : vector<8x512xf32> to vector<8x384xf32>
    %162 = arith.negf %161 : vector<8x384xf32>
    %163 = math.exp %162 : vector<8x384xf32>
    %cst_51 = arith.constant 1.000000e+00 : f32
    %164 = vector.broadcast %cst_51 : f32 to vector<8x384xf32>
    %165 = arith.addf %164, %163 : vector<8x384xf32>
    %166 = arith.divf %164, %165 : vector<8x384xf32>
    %167 = vector.extract_strided_slice %160 {offsets = [0, 384], sizes = [8, 128], strides = [1, 1]} : vector<8x512xf32> to vector<8x128xf32>
    %168 = math.tanh %167 : vector<8x128xf32>
    %169 = vector.extract_strided_slice %166 {offsets = [0, 0], sizes = [8, 128], strides = [1, 1]} : vector<8x384xf32> to vector<8x128xf32>
    %170 = vector.extract_strided_slice %166 {offsets = [0, 128], sizes = [8, 128], strides = [1, 1]} : vector<8x384xf32> to vector<8x128xf32>
    %171 = vector.extract_strided_slice %166 {offsets = [0, 256], sizes = [8, 128], strides = [1, 1]} : vector<8x384xf32> to vector<8x128xf32>
    %172 = arith.mulf %170, %153 : vector<8x128xf32>
    %173 = arith.mulf %169, %168 : vector<8x128xf32>
    %174 = arith.addf %172, %173 : vector<8x128xf32>
    %175 = math.tanh %174 : vector<8x128xf32>
    %176 = arith.mulf %171, %175 : vector<8x128xf32>
    %c0_52 = arith.constant 0 : index
    %c0_53 = arith.constant 0 : index
    %177 = vector.load %arg10[%c0_52, %c0_53] : memref<8x128xf32, #tpu.memory_space<vmem>>, vector<8x128xf32>
    tpu.vector_store %arg10[%c0_52, %c0_53], %176 {strides = array<i32>} : memref<8x128xf32, #tpu.memory_space<vmem>>, vector<8x128xf32>,
    %c0_54 = arith.constant 0 : index
    %c0_55 = arith.constant 0 : index
    %178 = vector.load %arg11[%c0_54, %c0_55] : memref<8x128xf32, #tpu.memory_space<vmem>>, vector<8x128xf32>
    tpu.vector_store %arg11[%c0_54, %c0_55], %174 {strides = array<i32>} : memref<8x128xf32, #tpu.memory_space<vmem>>, vector<8x128xf32>,
    %179 = arith.truncf %176 : vector<8x128xf32> to vector<8x128xbf16>
    %c0_56 = arith.constant 0 : index
    %c0_57 = arith.constant 0 : index
    %180 = vector.load %arg6[%c0_56, %c0_57] : memref<128x128xbf16, #tpu.memory_space<vmem>>, vector<128x128xbf16>
    %cst_58 = arith.constant dense<0.000000e+00> : vector<8x128xf32>
    %181 = tpu.matmul %179, %180, %cst_58 {dimension_numbers = #tpu.dot_dimension_numbers<[1], [0], [0], [1], [0, 0, 1, 1], [], []>} : vector<8x128xbf16>, vector<128x128xbf16>, vector<8x128xf32> -> vector<8x128xf32>
    %c0_59 = arith.constant 0 : index
    %c0_60 = arith.constant 0 : index
    %182 = vector.load %arg7[%c0_59, %c0_60] : memref<1x128xf32, #tpu.memory_space<vmem>>, vector<1x128xf32>
    %183 = vector.broadcast %182 : vector<1x128xf32> to vector<8x128xf32>
    %184 = arith.addf %181, %183 : vector<8x128xf32>
    %cst_61 = arith.constant 0.000000e+00 : f32
    %185 = vector.broadcast %cst_61 : f32 to vector<8x128xf32>
    %186 = arith.maximumf %184, %185 : vector<8x128xf32>
    %187 = arith.truncf %186 : vector<8x128xf32> to vector<8x128xbf16>
    %c0_62 = arith.constant 0 : index
    %c0_63 = arith.constant 0 : index
    %188 = vector.load %arg8[%c0_62, %c0_63] : memref<128x128xbf16, #tpu.memory_space<vmem>>, vector<128x128xbf16>
    %cst_64 = arith.constant dense<0.000000e+00> : vector<8x128xf32>
    %189 = tpu.matmul %187, %188, %cst_64 {dimension_numbers = #tpu.dot_dimension_numbers<[1], [0], [0], [1], [0, 0, 1, 1], [], []>} : vector<8x128xbf16>, vector<128x128xbf16>, vector<8x128xf32> -> vector<8x128xf32>
    %c0_65 = arith.constant 0 : index
    %c0_66 = arith.constant 0 : index
    %190 = vector.load %arg9[%c0_65, %c0_66] : memref<1x128xf32, #tpu.memory_space<vmem>>, vector<1x128xf32>
    %191 = vector.broadcast %190 : vector<1x128xf32> to vector<8x128xf32>
    %192 = arith.addf %189, %191 : vector<8x128xf32>
    %193 = tpu.iota {dimensions = array<i32: 1>} : vector<8x128xi32>
    %c8_i32 = arith.constant 8 : i32
    %194 = vector.broadcast %c8_i32 : i32 to vector<8x128xi32>
    %195 = arith.cmpi slt, %193, %194 : vector<8x128xi32>
    %c8_i32_67 = arith.constant 8 : i32
    %196 = vector.broadcast %c8_i32_67 : i32 to vector<8x128xi32>
    %197 = arith.cmpi sge, %193, %196 : vector<8x128xi32>
    %c24_i32 = arith.constant 24 : i32
    %198 = vector.broadcast %c24_i32 : i32 to vector<8x128xi32>
    %199 = arith.cmpi slt, %193, %198 : vector<8x128xi32>
    %200 = arith.andi %197, %199 : vector<8x128xi1>
    %c40_i32 = arith.constant 40 : i32
    %201 = vector.broadcast %c40_i32 : i32 to vector<8x128xi32>
    %202 = arith.cmpi sge, %193, %201 : vector<8x128xi32>
    %c48_i32 = arith.constant 48 : i32
    %203 = vector.broadcast %c48_i32 : i32 to vector<8x128xi32>
    %204 = arith.cmpi slt, %193, %203 : vector<8x128xi32>
    %205 = arith.andi %202, %204 : vector<8x128xi1>
    %c48_i32_68 = arith.constant 48 : i32
    %206 = vector.broadcast %c48_i32_68 : i32 to vector<8x128xi32>
    %207 = arith.cmpi sge, %193, %206 : vector<8x128xi32>
    %c56_i32 = arith.constant 56 : i32
    %208 = vector.broadcast %c56_i32 : i32 to vector<8x128xi32>
    %209 = arith.cmpi slt, %193, %208 : vector<8x128xi32>
    %210 = arith.andi %207, %209 : vector<8x128xi1>
    %c56_i32_69 = arith.constant 56 : i32
    %211 = vector.broadcast %c56_i32_69 : i32 to vector<8x128xi32>
    %212 = arith.cmpi slt, %193, %211 : vector<8x128xi32>
    %cst_70 = arith.constant 0xFF800000 : f32
    %213 = vector.broadcast %cst_70 : f32 to vector<8x128xf32>
    %214 = arith.select %195, %192, %213 : vector<8x128xi1>, vector<8x128xf32>
    %cst_71 = arith.constant dense<0xFF800000> : vector<8xf32>
    %215 = vector.multi_reduction <maximumf>, %214, %cst_71 [1] : vector<8x128xf32> to vector<8xf32>
    %216 = vector.shape_cast %215 : vector<8xf32> to vector<8x1xf32>
    %217 = vector.broadcast %216 : vector<8x1xf32> to vector<8x128xf32>
    %218 = arith.subf %192, %217 : vector<8x128xf32>
    %219 = math.exp %218 : vector<8x128xf32>
    %cst_72 = arith.constant 0.000000e+00 : f32
    %220 = vector.broadcast %cst_72 : f32 to vector<8x128xf32>
    %221 = arith.select %195, %219, %220 : vector<8x128xi1>, vector<8x128xf32>
    %cst_73 = arith.constant dense<0.000000e+00> : vector<8xf32>
    %222 = vector.multi_reduction <add>, %221, %cst_73 [1] : vector<8x128xf32> to vector<8xf32>
    %223 = vector.shape_cast %222 : vector<8xf32> to vector<8x1xf32>
    %224 = vector.broadcast %223 : vector<8x1xf32> to vector<8x128xf32>
    %225 = arith.divf %221, %224 : vector<8x128xf32>
    %cst_74 = arith.constant 0xFF800000 : f32
    %226 = vector.broadcast %cst_74 : f32 to vector<8x128xf32>
    %227 = arith.select %205, %192, %226 : vector<8x128xi1>, vector<8x128xf32>
    %cst_75 = arith.constant dense<0xFF800000> : vector<8xf32>
    %228 = vector.multi_reduction <maximumf>, %227, %cst_75 [1] : vector<8x128xf32> to vector<8xf32>
    %229 = vector.shape_cast %228 : vector<8xf32> to vector<8x1xf32>
    %230 = vector.broadcast %229 : vector<8x1xf32> to vector<8x128xf32>
    %231 = arith.subf %192, %230 : vector<8x128xf32>
    %232 = math.exp %231 : vector<8x128xf32>
    %cst_76 = arith.constant 0.000000e+00 : f32
    %233 = vector.broadcast %cst_76 : f32 to vector<8x128xf32>
    %234 = arith.select %205, %232, %233 : vector<8x128xi1>, vector<8x128xf32>
    %cst_77 = arith.constant dense<0.000000e+00> : vector<8xf32>
    %235 = vector.multi_reduction <add>, %234, %cst_77 [1] : vector<8x128xf32> to vector<8xf32>
    %236 = vector.shape_cast %235 : vector<8xf32> to vector<8x1xf32>
    %237 = vector.broadcast %236 : vector<8x1xf32> to vector<8x128xf32>
    %238 = arith.divf %234, %237 : vector<8x128xf32>
    %239 = math.exp %192 : vector<8x128xf32>
    %240 = arith.select %200, %239, %192 : vector<8x128xi1>, vector<8x128xf32>
    %cst_78 = arith.constant 9.99999997E-7 : f32
    %241 = vector.broadcast %cst_78 : f32 to vector<8x128xf32>
    %242 = arith.addf %192, %241 : vector<8x128xf32>
    %243 = arith.select %210, %242, %240 : vector<8x128xi1>, vector<8x128xf32>
    %244 = arith.select %195, %225, %243 : vector<8x128xi1>, vector<8x128xf32>
    %245 = arith.select %205, %238, %244 : vector<8x128xi1>, vector<8x128xf32>
    %cst_79 = arith.constant 0.000000e+00 : f32
    %246 = vector.broadcast %cst_79 : f32 to vector<8x128xf32>
    %247 = arith.select %212, %245, %246 : vector<8x128xi1>, vector<8x128xf32>
    %c0_80 = arith.constant 0 : index
    %c0_81 = arith.constant 0 : index
    %248 = vector.load %arg12[%c0_80, %c0_81] : memref<8x128xf32, #tpu.memory_space<vmem>>, vector<8x128xf32>
    tpu.vector_store %arg12[%c0_80, %c0_81], %247 {strides = array<i32>} : memref<8x128xf32, #tpu.memory_space<vmem>>, vector<8x128xf32>,
    return
  }
}

</mosaic_0001>

<llo_original>
// kernel: writer_forward.1
$region0: #{writer_forward.1}
  #allocation0 [shape = 'u32[]', space=smem, size = 0x4, offset = 0x4, fixed_abs, tag = 'smem constant byte address 0x4 - core index']
  #allocation1 [shape = 'u32[72,128]{1,0:T(1,128)}', space=vmem, size = 0x9000, scoped, tag = 'internal scratch']
  #allocation2 [shape = 'f32[64,512]{1,0:T(8,128)}', space=vmem, size = 0x20000, scoped, tag = 'scratch operand']
  %s0 = inlined_call_operand.vmem [shape: bf16[64,8], index: 0, kind: input, shape index: {}]
  %s1 = inlined_call_operand.hbm [shape: bf16[8,512], index: 1, kind: input, shape index: {}]
  %s2 = inlined_call_operand.vmem [shape: f32[1,512], index: 2, kind: input, shape index: {}]
  %s3 = inlined_call_operand.hbm [shape: bf16[128,512], index: 3, kind: input, shape index: {}]
  %s4 = inlined_call_operand.vmem [shape: f32[8,128], index: 4, kind: input, shape index: {}, may-alias: {4,5}]
  %s5 = inlined_call_operand.vmem [shape: f32[8,128], index: 5, kind: input, shape index: {}, may-alias: {4,5}]
  %s6 = inlined_call_operand.vmem [shape: bf16[128,128], index: 6, kind: input, shape index: {}]
  %s7 = inlined_call_operand.vmem [shape: f32[1,128], index: 7, kind: input, shape index: {}]
  %s8 = inlined_call_operand.hbm [shape: bf16[128,128], index: 8, kind: input, shape index: {}]
  %s9 = inlined_call_operand.vmem [shape: f32[1,128], index: 9, kind: input, shape index: {}]
  %s10 = inlined_call_operand.vmem [shape: f32[8,128], index: 10, kind: output, shape index: {0}]
  %s11 = inlined_call_operand.vmem [shape: f32[8,128], index: 11, kind: output, shape index: {1}]
  %s12 = inlined_call_operand.vmem [shape: f32[8,128], index: 12, kind: output, shape index: {2}]
  %13 = xla_tuple %s10, %s11, %s12
  %s14 = sld [smem:[#allocation0]]
  $region78: #{writer_forward.1} parent=0
    _
  %s16 = ssub.s32 1, %s14
  %s17 = scalar_select 0, %s16, %s14
  $region1: #{writer_forward.1} parent=0
    #allocation3 [shape = 'u8[8192]{0}', space=vmem, size = 0x2000, scoped, tag = 'input window, operand 1, single buffered']
    #allocation4 [shape = 's32[1]{0}', space=sflag, size = 0x4, scoped, tag = 'scoped memory for writer_forward.1']
    #allocation5 [shape = 'u8[131072]{0}', space=vmem, size = 0x20000, scoped, tag = 'input window, operand 3, single buffered']
    #allocation6 [shape = 's32[1]{0}', space=sflag, size = 0x4, scoped, tag = 'scoped memory for writer_forward.1']
    #allocation7 [shape = 'u8[32768]{0}', space=vmem, size = 0x8000, scoped, tag = 'input window, operand 8, single buffered']
    %18 = vsyncpa [#allocation4], 0
    %19 = vsyncpa [#allocation6], 0
    // Predicated region
    $region2: #{writer_forward.1} parent=1 // pred_check
      _
    $region3: #{writer_forward.1} parent=1 // pred_check_branch
      %21 = sbr.rel (0) target = $region5
    $region4: #{writer_forward.1} parent=1 // pred_region
      _
    $region5: #{writer_forward.1} parent=1 // pred_fallthru
      _
    // Predicated region
    $region6: #{writer_forward.1} parent=1 // pred_check
      _
    $region7: #{writer_forward.1} parent=1 // pred_check_branch
      %23 = sbr.rel (0) target = $region9
    $region8: #{writer_forward.1} parent=1 // pred_region
      %25 = vsyncadd [#allocation4], 0
      %s27 = sshll.u32 %s1, 4
      %s28 = int_to_ptr.hbm [resolvable:$true] %s27
      %s29 = sshll.u32 [#allocation3], 4
      %s30 = int_to_ptr.vmem [resolvable:$true] %s29
      %32 = dma.hbm_to_vmem [thread:$0]  %s28, 256, %s30, [#allocation4]
    $region9: #{writer_forward.1} parent=1 // pred_fallthru
      _
    // Predicated region
    $region10: #{writer_forward.1} parent=1 // pred_check
      _
    $region11: #{writer_forward.1} parent=1 // pred_check_branch
      %34 = sbr.rel (0) target = $region13
    $region12: #{writer_forward.1} parent=1 // pred_region
      _
    $region13: #{writer_forward.1} parent=1 // pred_fallthru
      _
    // Predicated region
    $region14: #{writer_forward.1} parent=1 // pred_check
      _
    $region15: #{writer_forward.1} parent=1 // pred_check_branch
      %36 = sbr.rel (0) target = $region17
    $region16: #{writer_forward.1} parent=1 // pred_region
      %38 = vsyncadd [#allocation6], 0
      %s39 = sshll.u32 %s3, 4
      %s40 = int_to_ptr.hbm [resolvable:$true] %s39
      %s41 = sshll.u32 [#allocation5], 4
      %s42 = int_to_ptr.vmem [resolvable:$true] %s41
      %47 = dma.hbm_to_vmem [thread:$0]  %s40, 4096, %s42, [#allocation6], 256, 256, 16
    $region17: #{writer_forward.1} parent=1 // pred_fallthru
      _
    // Predicated region
    $region18: #{writer_forward.1} parent=1 // pred_check
      _
    $region19: #{writer_forward.1} parent=1 // pred_check_branch
      %49 = sbr.rel (0) target = $region21
    $region20: #{writer_forward.1} parent=1 // pred_region
      _
    $region21: #{writer_forward.1} parent=1 // pred_fallthru
      _
    // Predicated region
    $region22: #{writer_forward.1} parent=1 // pred_check
      _
    $region23: #{writer_forward.1} parent=1 // pred_check_branch
      %51 = sbr.rel (0) target = $region25
    $region24: #{writer_forward.1} parent=1 // pred_region
      _
    $region25: #{writer_forward.1} parent=1 // pred_fallthru
      _
    // Predicated region
    $region26: #{writer_forward.1} parent=1 // pred_check
      _
    $region27: #{writer_forward.1} parent=1 // pred_check_branch
      %53 = sbr.rel (0) target = $region29
    $region28: #{writer_forward.1} parent=1 // pred_region
      _
    $region29: #{writer_forward.1} parent=1 // pred_fallthru
      _
    // Predicated region
    $region30: #{writer_forward.1} parent=1 // pred_check
      _
    $region31: #{writer_forward.1} parent=1 // pred_check_branch
      %55 = sbr.rel (0) target = $region33
    $region32: #{writer_forward.1} parent=1 // pred_region
      _
    $region33: #{writer_forward.1} parent=1 // pred_fallthru
      _
    // Predicated region
    $region34: #{writer_forward.1} parent=1 // pred_check
      _
    $region35: #{writer_forward.1} parent=1 // pred_check_branch
      %57 = sbr.rel (0) target = $region37
    $region36: #{writer_forward.1} parent=1 // pred_region
      %59 = vsyncadd [#allocation6], 0
      %s60 = sshll.u32 %s8, 4
      %s61 = int_to_ptr.hbm [resolvable:$true] %s60
      %s62 = sshll.u32 [#allocation7], 4
      %s63 = int_to_ptr.vmem [resolvable:$true] %s62
      %68 = dma.hbm_to_vmem [thread:$0]  %s61, 1024, %s63, [#allocation6], 64, 64, 4
    $region37: #{writer_forward.1} parent=1 // pred_fallthru
      _
    // Predicated region
    $region38: #{writer_forward.1} parent=1 // pred_check
      _
    $region39: #{writer_forward.1} parent=1 // pred_check_branch
      %70 = sbr.rel (0) target = $region41
    $region40: #{writer_forward.1} parent=1 // pred_region
      _
    $region41: #{writer_forward.1} parent=1 // pred_fallthru
      _
    // Predicated region
    $region42: #{writer_forward.1} parent=1 // pred_check
      _
    $region43: #{writer_forward.1} parent=1 // pred_check_branch
      %72 = sbr.rel (0) target = $region45
    $region44: #{writer_forward.1} parent=1 // pred_region
      %74 = dma.done [#allocation4], 256
    $region45: #{writer_forward.1} parent=1 // pred_fallthru
      _
    // Predicated region
    $region46: #{writer_forward.1} parent=1 // pred_check
      _
    $region47: #{writer_forward.1} parent=1 // pred_check_branch
      %76 = sbr.rel (0) target = $region49
    $region48: #{writer_forward.1} parent=1 // pred_region
      %78 = dma.done [#allocation6], 4096
    $region49: #{writer_forward.1} parent=1 // pred_fallthru
      _
    // Predicated region
    $region50: #{writer_forward.1} parent=1 // pred_check
      _
    $region51: #{writer_forward.1} parent=1 // pred_check_branch
      %80 = sbr.rel (0) target = $region53
    $region52: #{writer_forward.1} parent=1 // pred_region
      %82 = dma.done [#allocation6], 1024
    $region53: #{writer_forward.1} parent=1 // pred_fallthru
      _
    %v84 = vld [vmem:[%s0] sm:$0xf]
    %v85 = vld [vmem:[%s0 + $0x4] sm:$0xf]
    %v86 = vld [vmem:[%s0 + $0x8] sm:$0xf]
    %v87 = vld [vmem:[%s0 + $0xc] sm:$0xf]
    %v88 = vld [vmem:[%s0 + $0x10] sm:$0xf]
    %v89 = vld [vmem:[%s0 + $0x14] sm:$0xf]
    %v90 = vld [vmem:[%s0 + $0x18] sm:$0xf]
    %v91 = vld [vmem:[%s0 + $0x1c] sm:$0xf]
    %v92 = vld [vmem:[#allocation3] sm:$0xff]
    %v93 = vld [vmem:[#allocation3 + $0x8] sm:$0xff]
    %v94 = vld [vmem:[%s2] sm:$0xf]
    %v96 = vperm.slane %v94, 0
    %v97 = vperm.slane %v94, 1
    %v98 = vperm.slane %v94, 2
    %v99 = vperm.slane %v94, 3
    %v112 = vunpack.c.l.b16 %v84
    %v113 = vunpack.c.l.b16 %v85
    %v114 = vunpack.c.l.b16 %v86
    %v115 = vunpack.c.l.b16 %v87
    %v116 = vunpack.c.l.b16 %v88
    %v117 = vunpack.c.l.b16 %v89
    %v118 = vunpack.c.l.b16 %v90
    %v119 = vunpack.c.l.b16 %v91
    %v120 = vpack.c.b16 %v113, %v112
    %v121 = vpack.c.b16 %v115, %v114
    %v122 = vpack.c.b16 %v117, %v116
    %v123 = vpack.c.b16 %v119, %v118
    %v126 = vunpack.c.l.b16 %v92
    %v127 = vunpack.c.h.b16 %v92
    %v128 = vunpack.c.l.b16 %v93
    %v129 = vunpack.c.h.b16 %v93
    %v130 = vpack.c.b16 %v126, %v126
    %v131 = vpack.c.b16 %v127, %v127
    %v132 = vpack.c.b16 %v128, %v128
    %v133 = vpack.c.b16 %v129, %v129
    %vm134 = vcmask 64512
    %v136 = vsel %vm134, %v120, 0
    %v139 = vsel %vm134, %v121, 0
    %v142 = vsel %vm134, %v122, 0
    %v145 = vsel %vm134, %v123, 0
    %vm147 = vcmask 1043456
    %v149 = vsel %vm147, %v130, 0
    %v152 = vsel %vm147, %v131, 0
    %v155 = vsel %vm147, %v132, 0
    %v158 = vsel %vm147, %v133, 0
    %160 = vmatpush.bf16.msra.mxu0 0
    %161 = vmatpush.bf16.msra.mxu0 0
    %162 = vmatpush.bf16.msra.mxu0 0
    %163 = vmatpush.bf16.msra.mxu0 0
    %164 = vmatpush.bf16.msra.mxu0 0
    %165 = vmatpush.bf16.msra.mxu0 0
    %166 = vmatpush.bf16.msra.mxu0 0
    %167 = vmatpush.bf16.msra.mxu0 %v149
    %168 = vmatmul.bf16.gmra.mxu0 %v136
    %v169 = vpop.f32.mrf.mxu0
    %v170 = vadd.f32 %v96, %v169
    %v171 = vpop.f32.mrf.mxu0
    %v172 = vadd.f32 %v96, %v171
    %173 = vmatmul.bf16.gmra.mxu0 %v139
    %v174 = vpop.f32.mrf.mxu0
    %v175 = vadd.f32 %v96, %v174
    %v176 = vpop.f32.mrf.mxu0
    %v177 = vadd.f32 %v96, %v176
    %178 = vmatmul.bf16.gmra.mxu0 %v142
    %v179 = vpop.f32.mrf.mxu0
    %v180 = vadd.f32 %v96, %v179
    %v181 = vpop.f32.mrf.mxu0
    %v182 = vadd.f32 %v96, %v181
    %183 = vmatmul.bf16.gmra.mxu0 %v145
    %v184 = vpop.f32.mrf.mxu0
    %v185 = vadd.f32 %v96, %v184
    %v186 = vpop.f32.mrf.mxu0
    %v187 = vadd.f32 %v96, %v186
    %188 = vdwg.mxu0
    %189 = vmatpush.bf16.msra.mxu0 0
    %190 = vmatpush.bf16.msra.mxu0 0
    %191 = vmatpush.bf16.msra.mxu0 0
    %192 = vmatpush.bf16.msra.mxu0 0
    %193 = vmatpush.bf16.msra.mxu0 0
    %194 = vmatpush.bf16.msra.mxu0 0
    %195 = vmatpush.bf16.msra.mxu0 0
    %196 = vmatpush.bf16.msra.mxu0 %v152
    %197 = vmatmul.bf16.gmra.mxu0 %v136
    %v198 = vpop.f32.mrf.mxu0
    %v199 = vadd.f32 %v97, %v198
    %v200 = vpop.f32.mrf.mxu0
    %v201 = vadd.f32 %v97, %v200
    %202 = vmatmul.bf16.gmra.mxu0 %v139
    %v203 = vpop.f32.mrf.mxu0
    %v204 = vadd.f32 %v97, %v203
    %v205 = vpop.f32.mrf.mxu0
    %v206 = vadd.f32 %v97, %v205
    %207 = vmatmul.bf16.gmra.mxu0 %v142
    %v208 = vpop.f32.mrf.mxu0
    %v209 = vadd.f32 %v97, %v208
    %v210 = vpop.f32.mrf.mxu0
    %v211 = vadd.f32 %v97, %v210
    %212 = vmatmul.bf16.gmra.mxu0 %v145
    %v213 = vpop.f32.mrf.mxu0
    %v214 = vadd.f32 %v97, %v213
    %v215 = vpop.f32.mrf.mxu0
    %v216 = vadd.f32 %v97, %v215
    %217 = vdwg.mxu0
    %218 = vmatpush.bf16.msra.mxu0 0
    %219 = vmatpush.bf16.msra.mxu0 0
    %220 = vmatpush.bf16.msra.mxu0 0
    %221 = vmatpush.bf16.msra.mxu0 0
    %222 = vmatpush.bf16.msra.mxu0 0
    %223 = vmatpush.bf16.msra.mxu0 0
    %224 = vmatpush.bf16.msra.mxu0 0
    %225 = vmatpush.bf16.msra.mxu0 %v155
    %226 = vmatmul.bf16.gmra.mxu0 %v136
    %v227 = vpop.f32.mrf.mxu0
    %v228 = vadd.f32 %v98, %v227
    %v229 = vpop.f32.mrf.mxu0
    %v230 = vadd.f32 %v98, %v229
    %231 = vmatmul.bf16.gmra.mxu0 %v139
    %v232 = vpop.f32.mrf.mxu0
    %v233 = vadd.f32 %v98, %v232
    %v234 = vpop.f32.mrf.mxu0
    %v235 = vadd.f32 %v98, %v234
    %236 = vmatmul.bf16.gmra.mxu0 %v142
    %v237 = vpop.f32.mrf.mxu0
    %v238 = vadd.f32 %v98, %v237
    %v239 = vpop.f32.mrf.mxu0
    %v240 = vadd.f32 %v98, %v239
    %241 = vmatmul.bf16.gmra.mxu0 %v145
    %v242 = vpop.f32.mrf.mxu0
    %v243 = vadd.f32 %v98, %v242
    %v244 = vpop.f32.mrf.mxu0
    %v245 = vadd.f32 %v98, %v244
    %246 = vdwg.mxu0
    %247 = vmatpush.bf16.msra.mxu0 0
    %248 = vmatpush.bf16.msra.mxu0 0
    %249 = vmatpush.bf16.msra.mxu0 0
    %250 = vmatpush.bf16.msra.mxu0 0
    %251 = vmatpush.bf16.msra.mxu0 0
    %252 = vmatpush.bf16.msra.mxu0 0
    %253 = vmatpush.bf16.msra.mxu0 0
    %254 = vmatpush.bf16.msra.mxu0 %v158
    %255 = vmatmul.bf16.gmra.mxu0 %v136
    %v256 = vpop.f32.mrf.mxu0
    %v257 = vadd.f32 %v99, %v256
    %v258 = vpop.f32.mrf.mxu0
    %v259 = vadd.f32 %v99, %v258
    %260 = vmatmul.bf16.gmra.mxu0 %v139
    %v261 = vpop.f32.mrf.mxu0
    %v262 = vadd.f32 %v99, %v261
    %v263 = vpop.f32.mrf.mxu0
    %v264 = vadd.f32 %v99, %v263
    %265 = vmatmul.bf16.gmra.mxu0 %v142
    %v266 = vpop.f32.mrf.mxu0
    %v267 = vadd.f32 %v99, %v266
    %v268 = vpop.f32.mrf.mxu0
    %v269 = vadd.f32 %v99, %v268
    %270 = vmatmul.bf16.gmra.mxu0 %v145
    %v271 = vpop.f32.mrf.mxu0
    %v272 = vadd.f32 %v99, %v271
    %v273 = vpop.f32.mrf.mxu0
    %v274 = vadd.f32 %v99, %v273
    %275 = vdwg.mxu0
    %276 = vst [vmem:[#allocation2] sm:$0xff] %v170
    %277 = vst [vmem:[#allocation2 + $0x8] sm:$0xff] %v199
    %278 = vst [vmem:[#allocation2 + $0x10] sm:$0xff] %v228
    %279 = vst [vmem:[#allocation2 + $0x18] sm:$0xff] %v257
    %280 = vst [vmem:[#allocation2 + $0x20] sm:$0xff] %v172
    %281 = vst [vmem:[#allocation2 + $0x28] sm:$0xff] %v201
    %282 = vst [vmem:[#allocation2 + $0x30] sm:$0xff] %v230
    %283 = vst [vmem:[#allocation2 + $0x38] sm:$0xff] %v259
    %284 = vst [vmem:[#allocation2 + $0x40] sm:$0xff] %v175
    %285 = vst [vmem:[#allocation2 + $0x48] sm:$0xff] %v204
    %286 = vst [vmem:[#allocation2 + $0x50] sm:$0xff] %v233
    %287 = vst [vmem:[#allocation2 + $0x58] sm:$0xff] %v262
    %288 = vst [vmem:[#allocation2 + $0x60] sm:$0xff] %v177
    %289 = vst [vmem:[#allocation2 + $0x68] sm:$0xff] %v206
    %290 = vst [vmem:[#allocation2 + $0x70] sm:$0xff] %v235
    %291 = vst [vmem:[#allocation2 + $0x78] sm:$0xff] %v264
    %292 = vst [vmem:[#allocation2 + $0x80] sm:$0xff] %v180
    %293 = vst [vmem:[#allocation2 + $0x88] sm:$0xff] %v209
    %294 = vst [vmem:[#allocation2 + $0x90] sm:$0xff] %v238
    %295 = vst [vmem:[#allocation2 + $0x98] sm:$0xff] %v267
    %296 = vst [vmem:[#allocation2 + $0xa0] sm:$0xff] %v182
    %297 = vst [vmem:[#allocation2 + $0xa8] sm:$0xff] %v211
    %298 = vst [vmem:[#allocation2 + $0xb0] sm:$0xff] %v240
    %299 = vst [vmem:[#allocation2 + $0xb8] sm:$0xff] %v269
    %300 = vst [vmem:[#allocation2 + $0xc0] sm:$0xff] %v185
    %301 = vst [vmem:[#allocation2 + $0xc8] sm:$0xff] %v214
    %302 = vst [vmem:[#allocation2 + $0xd0] sm:$0xff] %v243
    %303 = vst [vmem:[#allocation2 + $0xd8] sm:$0xff] %v272
    %304 = vst [vmem:[#allocation2 + $0xe0] sm:$0xff] %v187
    %305 = vst [vmem:[#allocation2 + $0xe8] sm:$0xff] %v216
    %306 = vst [vmem:[#allocation2 + $0xf0] sm:$0xff] %v245
    %307 = vst [vmem:[#allocation2 + $0xf8] sm:$0xff] %v274
    %v308 = vld [vmem:[%s4] sm:$0xff]
    %v309 = vld [vmem:[%s5] sm:$0xff]
    %v310 = vld [vmem:[#allocation2] sm:$0xff]
    %v311 = vld [vmem:[#allocation2 + $0x8] sm:$0xff]
    %v312 = vld [vmem:[#allocation2 + $0x10] sm:$0xff]
    %v313 = vld [vmem:[#allocation2 + $0x18] sm:$0xff]
    %v314 = vpack.c.bf16 %v308, %v308
    %v315 = vld [vmem:[#allocation5] sm:$0xff]
    %v316 = vld [vmem:[#allocation5 + $0x8] sm:$0xff]
    %v317 = vld [vmem:[#allocation5 + $0x10] sm:$0xff]
    %v318 = vld [vmem:[#allocation5 + $0x18] sm:$0xff]
    %v319 = vld [vmem:[#allocation5 + $0x20] sm:$0xff]
    %v320 = vld [vmem:[#allocation5 + $0x28] sm:$0xff]
    %v321 = vld [vmem:[#allocation5 + $0x30] sm:$0xff]
    %v322 = vld [vmem:[#allocation5 + $0x38] sm:$0xff]
    %v323 = vld [vmem:[#allocation5 + $0x40] sm:$0xff]
    %v324 = vld [vmem:[#allocation5 + $0x48] sm:$0xff]
    %v325 = vld [vmem:[#allocation5 + $0x50] sm:$0xff]
    %v326 = vld [vmem:[#allocation5 + $0x58] sm:$0xff]
    %v327 = vld [vmem:[#allocation5 + $0x60] sm:$0xff]
    %v328 = vld [vmem:[#allocation5 + $0x68] sm:$0xff]
    %v329 = vld [vmem:[#allocation5 + $0x70] sm:$0xff]
    %v330 = vld [vmem:[#allocation5 + $0x78] sm:$0xff]
    %v331 = vld [vmem:[#allocation5 + $0x80] sm:$0xff]
    %v332 = vld [vmem:[#allocation5 + $0x88] sm:$0xff]
    %v333 = vld [vmem:[#allocation5 + $0x90] sm:$0xff]
    %v334 = vld [vmem:[#allocation5 + $0x98] sm:$0xff]
    %v335 = vld [vmem:[#allocation5 + $0xa0] sm:$0xff]
    %v336 = vld [vmem:[#allocation5 + $0xa8] sm:$0xff]
    %v337 = vld [vmem:[#allocation5 + $0xb0] sm:$0xff]
    %v338 = vld [vmem:[#allocation5 + $0xb8] sm:$0xff]
    %v339 = vld [vmem:[#allocation5 + $0xc0] sm:$0xff]
    %v340 = vld [vmem:[#allocation5 + $0xc8] sm:$0xff]
    %v341 = vld [vmem:[#allocation5 + $0xd0] sm:$0xff]
    %v342 = vld [vmem:[#allocation5 + $0xd8] sm:$0xff]
    %v343 = vld [vmem:[#allocation5 + $0xe0] sm:$0xff]
    %v344 = vld [vmem:[#allocation5 + $0xe8] sm:$0xff]
    %v345 = vld [vmem:[#allocation5 + $0xf0] sm:$0xff]
    %v346 = vld [vmem:[#allocation5 + $0xf8] sm:$0xff]
    %v379 = vunpack.c.l.b16 %v315
    %v380 = vunpack.c.h.b16 %v315
    %v381 = vunpack.c.l.b16 %v316
    %v382 = vunpack.c.h.b16 %v316
    %v383 = vunpack.c.l.b16 %v317
    %v384 = vunpack.c.h.b16 %v317
    %v385 = vunpack.c.l.b16 %v318
    %v386 = vunpack.c.h.b16 %v318
    %v387 = vunpack.c.l.b16 %v319
    %v388 = vunpack.c.h.b16 %v319
    %v389 = vunpack.c.l.b16 %v320
    %v390 = vunpack.c.h.b16 %v320
    %v391 = vunpack.c.l.b16 %v321
    %v392 = vunpack.c.h.b16 %v321
    %v393 = vunpack.c.l.b16 %v322
    %v394 = vunpack.c.h.b16 %v322
    %v395 = vunpack.c.l.b16 %v323
    %v396 = vunpack.c.h.b16 %v323
    %v397 = vunpack.c.l.b16 %v324
    %v398 = vunpack.c.h.b16 %v324
    %v399 = vunpack.c.l.b16 %v325
    %v400 = vunpack.c.h.b16 %v325
    %v401 = vunpack.c.l.b16 %v326
    %v402 = vunpack.c.h.b16 %v326
    %v403 = vunpack.c.l.b16 %v327
    %v404 = vunpack.c.h.b16 %v327
    %v405 = vunpack.c.l.b16 %v328
    %v406 = vunpack.c.h.b16 %v328
    %v407 = vunpack.c.l.b16 %v329
    %v408 = vunpack.c.h.b16 %v329
    %v409 = vunpack.c.l.b16 %v330
    %v410 = vunpack.c.h.b16 %v330
    %v411 = vunpack.c.l.b16 %v331
    %v412 = vunpack.c.h.b16 %v331
    %v413 = vunpack.c.l.b16 %v332
    %v414 = vunpack.c.h.b16 %v332
    %v415 = vunpack.c.l.b16 %v333
    %v416 = vunpack.c.h.b16 %v333
    %v417 = vunpack.c.l.b16 %v334
    %v418 = vunpack.c.h.b16 %v334
    %v419 = vunpack.c.l.b16 %v335
    %v420 = vunpack.c.h.b16 %v335
    %v421 = vunpack.c.l.b16 %v336
    %v422 = vunpack.c.h.b16 %v336
    %v423 = vunpack.c.l.b16 %v337
    %v424 = vunpack.c.h.b16 %v337
    %v425 = vunpack.c.l.b16 %v338
    %v426 = vunpack.c.h.b16 %v338
    %v427 = vunpack.c.l.b16 %v339
    %v428 = vunpack.c.h.b16 %v339
    %v429 = vunpack.c.l.b16 %v340
    %v430 = vunpack.c.h.b16 %v340
    %v431 = vunpack.c.l.b16 %v341
    %v432 = vunpack.c.h.b16 %v341
    %v433 = vunpack.c.l.b16 %v342
    %v434 = vunpack.c.h.b16 %v342
    %v435 = vunpack.c.l.b16 %v343
    %v436 = vunpack.c.h.b16 %v343
    %v437 = vunpack.c.l.b16 %v344
    %v438 = vunpack.c.h.b16 %v344
    %v439 = vunpack.c.l.b16 %v345
    %v440 = vunpack.c.h.b16 %v345
    %v441 = vunpack.c.l.b16 %v346
    %v442 = vunpack.c.h.b16 %v346
    %v443 = vpack.c.b16 %v383, %v379
    %v444 = vpack.c.b16 %v384, %v380
    %v445 = vpack.c.b16 %v385, %v381
    %v446 = vpack.c.b16 %v386, %v382
    %v447 = vpack.c.b16 %v391, %v387
    %v448 = vpack.c.b16 %v392, %v388
    %v449 = vpack.c.b16 %v393, %v389
    %v450 = vpack.c.b16 %v394, %v390
    %v451 = vpack.c.b16 %v399, %v395
    %v452 = vpack.c.b16 %v400, %v396
    %v453 = vpack.c.b16 %v401, %v397
    %v454 = vpack.c.b16 %v402, %v398
    %v455 = vpack.c.b16 %v407, %v403
    %v456 = vpack.c.b16 %v408, %v404
    %v457 = vpack.c.b16 %v409, %v405
    %v458 = vpack.c.b16 %v410, %v406
    %v459 = vpack.c.b16 %v415, %v411
    %v460 = vpack.c.b16 %v416, %v412
    %v461 = vpack.c.b16 %v417, %v413
    %v462 = vpack.c.b16 %v418, %v414
    %v463 = vpack.c.b16 %v423, %v419
    %v464 = vpack.c.b16 %v424, %v420
    %v465 = vpack.c.b16 %v425, %v421
    %v466 = vpack.c.b16 %v426, %v422
    %v467 = vpack.c.b16 %v431, %v427
    %v468 = vpack.c.b16 %v432, %v428
    %v469 = vpack.c.b16 %v433, %v429
    %v470 = vpack.c.b16 %v434, %v430
    %v471 = vpack.c.b16 %v439, %v435
    %v472 = vpack.c.b16 %v440, %v436
    %v473 = vpack.c.b16 %v441, %v437
    %v474 = vpack.c.b16 %v442, %v438
    %507 = vmatpush.bf16.msra.mxu0 %v471
    %508 = vmatpush.bf16.msra.mxu0 %v467
    %509 = vmatpush.bf16.msra.mxu0 %v463
    %510 = vmatpush.bf16.msra.mxu0 %v459
    %511 = vmatpush.bf16.msra.mxu0 %v455
    %512 = vmatpush.bf16.msra.mxu0 %v451
    %513 = vmatpush.bf16.msra.mxu0 %v447
    %514 = vmatpush.bf16.msra.mxu0 %v443
    %515 = vmatmul.bf16.gmra.mxu0 %v314
    %v516 = vpop.f32.mrf.mxu0
    %v517 = vadd.f32 0.0, %v516
    %v518 = vpop.f32.mrf.mxu0
    %519 = vdwg.mxu0
    %520 = vmatpush.bf16.msra.mxu0 %v472
    %521 = vmatpush.bf16.msra.mxu0 %v468
    %522 = vmatpush.bf16.msra.mxu0 %v464
    %523 = vmatpush.bf16.msra.mxu0 %v460
    %524 = vmatpush.bf16.msra.mxu0 %v456
    %525 = vmatpush.bf16.msra.mxu0 %v452
    %526 = vmatpush.bf16.msra.mxu0 %v448
    %527 = vmatpush.bf16.msra.mxu0 %v444
    %528 = vmatmul.bf16.gmra.mxu0 %v314
    %v529 = vpop.f32.mrf.mxu0
    %v530 = vadd.f32 0.0, %v529
    %v531 = vpop.f32.mrf.mxu0
    %532 = vdwg.mxu0
    %533 = vmatpush.bf16.msra.mxu0 %v473
    %534 = vmatpush.bf16.msra.mxu0 %v469
    %535 = vmatpush.bf16.msra.mxu0 %v465
    %536 = vmatpush.bf16.msra.mxu0 %v461
    %537 = vmatpush.bf16.msra.mxu0 %v457
    %538 = vmatpush.bf16.msra.mxu0 %v453
    %539 = vmatpush.bf16.msra.mxu0 %v449
    %540 = vmatpush.bf16.msra.mxu0 %v445
    %541 = vmatmul.bf16.gmra.mxu0 %v314
    %v542 = vpop.f32.mrf.mxu0
    %v543 = vadd.f32 0.0, %v542
    %v544 = vpop.f32.mrf.mxu0
    %545 = vdwg.mxu0
    %546 = vmatpush.bf16.msra.mxu0 %v474
    %547 = vmatpush.bf16.msra.mxu0 %v470
    %548 = vmatpush.bf16.msra.mxu0 %v466
    %549 = vmatpush.bf16.msra.mxu0 %v462
    %550 = vmatpush.bf16.msra.mxu0 %v458
    %551 = vmatpush.bf16.msra.mxu0 %v454
    %552 = vmatpush.bf16.msra.mxu0 %v450
    %553 = vmatpush.bf16.msra.mxu0 %v446
    %554 = vmatmul.bf16.gmra.mxu0 %v314
    %v555 = vpop.f32.mrf.mxu0
    %v556 = vadd.f32 0.0, %v555
    %v557 = vpop.f32.mrf.mxu0
    %558 = vdwg.mxu0
    %v559 = vadd.f32 %v310, %v517
    %v560 = vadd.f32 %v311, %v530
    %v561 = vadd.f32 %v312, %v543
    %v562 = vadd.f32 %v313, %v556
    %v563 = vxor.u32 %v559, 2147483648
    %v564 = vxor.u32 %v560, 2147483648
    %v565 = vxor.u32 %v561, 2147483648
    %v566 = vmul.f32 %v563, 1.442695
    %v567 = vpow.pop %v566
    %v568 = vmul.f32 %v564, 1.442695
    %v569 = vpow.pop %v568
    %v570 = vmul.f32 %v565, 1.442695
    %v571 = vpow.pop %v570
    %v572 = vadd.f32 %v567, 1.0
    %v573 = vadd.f32 %v569, 1.0
    %v574 = vadd.f32 %v571, 1.0
    %v575 = vrcp.pop %v572
    %v576 = vmul.f32 %v572, %v575
    %v577 = vsub.f32 1.0, %v576
    %v578 = vmul.f32 %v575, %v577
    %v579 = vadd.f32 %v575, %v578
    %vm580 = vweird.f32 %v572
    %vm581 = vweird.f32 %v575
    %vm582 = vmor %vm580, %vm581
    %v583 = vsel %vm582, %v575, %v579
    %v584 = vand.u32 2147483647, %v572
    %vm585 = vcmp.eq.f32.partialorder %v584, 8.507059e+37
    %v586 = vand.u32 %v572, 2147483648
    %v587 = vor.u32 1.1754944e-38, %v586
    %v588 = vsel %vm585, %v587, %v583
    %v589 = vmul.f32 1.0, %v588
    %v590 = vrcp.pop %v573
    %v591 = vmul.f32 %v573, %v590
    %v592 = vsub.f32 1.0, %v591
    %v593 = vmul.f32 %v590, %v592
    %v594 = vadd.f32 %v590, %v593
    %vm595 = vweird.f32 %v573
    %vm596 = vweird.f32 %v590
    %vm597 = vmor %vm595, %vm596
    %v598 = vsel %vm597, %v590, %v594
    %v599 = vand.u32 2147483647, %v573
    %vm600 = vcmp.eq.f32.partialorder %v599, 8.507059e+37
    %v601 = vand.u32 %v573, 2147483648
    %v602 = vor.u32 1.1754944e-38, %v601
    %v603 = vsel %vm600, %v602, %v598
    %v604 = vmul.f32 1.0, %v603
    %v605 = vrcp.pop %v574
    %v606 = vmul.f32 %v574, %v605
    %v607 = vsub.f32 1.0, %v606
    %v608 = vmul.f32 %v605, %v607
    %v609 = vadd.f32 %v605, %v608
    %vm610 = vweird.f32 %v574
    %vm611 = vweird.f32 %v605
    %vm612 = vmor %vm610, %vm611
    %v613 = vsel %vm612, %v605, %v609
    %v614 = vand.u32 2147483647, %v574
    %vm615 = vcmp.eq.f32.partialorder %v614, 8.507059e+37
    %v616 = vand.u32 %v574, 2147483648
    %v617 = vor.u32 1.1754944e-38, %v616
    %v618 = vsel %vm615, %v617, %v613
    %v619 = vmul.f32 1.0, %v618
    %v620 = vtanh.pop %v562
    %v621 = vmul.f32 %v604, %v309
    %v622 = vmul.f32 %v589, %v620
    %v623 = vadd.f32 %v621, %v622
    %v624 = vtanh.pop %v623
    %v625 = vmul.f32 %v619, %v624
    %v626 = vld [vmem:[#allocation2 + $0x20] sm:$0xff]
    %v627 = vld [vmem:[#allocation2 + $0x28] sm:$0xff]
    %v628 = vld [vmem:[#allocation2 + $0x30] sm:$0xff]
    %v629 = vld [vmem:[#allocation2 + $0x38] sm:$0xff]
    %v630 = vpack.c.bf16 %v625, %v625
    %631 = vmatpush.bf16.msra.mxu0 %v471
    %632 = vmatpush.bf16.msra.mxu0 %v467
    %633 = vmatpush.bf16.msra.mxu0 %v463
    %634 = vmatpush.bf16.msra.mxu0 %v459
    %635 = vmatpush.bf16.msra.mxu0 %v455
    %636 = vmatpush.bf16.msra.mxu0 %v451
    %637 = vmatpush.bf16.msra.mxu0 %v447
    %638 = vmatpush.bf16.msra.mxu0 %v443
    %639 = vmatmul.bf16.gmra.mxu0 %v630
    %v640 = vpop.f32.mrf.mxu0
    %v641 = vadd.f32 0.0, %v640
    %v642 = vpop.f32.mrf.mxu0
    %643 = vdwg.mxu0
    %644 = vmatpush.bf16.msra.mxu0 %v472
    %645 = vmatpush.bf16.msra.mxu0 %v468
    %646 = vmatpush.bf16.msra.mxu0 %v464
    %647 = vmatpush.bf16.msra.mxu0 %v460
    %648 = vmatpush.bf16.msra.mxu0 %v456
    %649 = vmatpush.bf16.msra.mxu0 %v452
    %650 = vmatpush.bf16.msra.mxu0 %v448
    %651 = vmatpush.bf16.msra.mxu0 %v444
    %652 = vmatmul.bf16.gmra.mxu0 %v630
    %v653 = vpop.f32.mrf.mxu0
    %v654 = vadd.f32 0.0, %v653
    %v655 = vpop.f32.mrf.mxu0
    %656 = vdwg.mxu0
    %657 = vmatpush.bf16.msra.mxu0 %v473
    %658 = vmatpush.bf16.msra.mxu0 %v469
    %659 = vmatpush.bf16.msra.mxu0 %v465
    %660 = vmatpush.bf16.msra.mxu0 %v461
    %661 = vmatpush.bf16.msra.mxu0 %v457
    %662 = vmatpush.bf16.msra.mxu0 %v453
    %663 = vmatpush.bf16.msra.mxu0 %v449
    %664 = vmatpush.bf16.msra.mxu0 %v445
    %665 = vmatmul.bf16.gmra.mxu0 %v630
    %v666 = vpop.f32.mrf.mxu0
    %v667 = vadd.f32 0.0, %v666
    %v668 = vpop.f32.mrf.mxu0
    %669 = vdwg.mxu0
    %670 = vmatpush.bf16.msra.mxu0 %v474
    %671 = vmatpush.bf16.msra.mxu0 %v470
    %672 = vmatpush.bf16.msra.mxu0 %v466
    %673 = vmatpush.bf16.msra.mxu0 %v462
    %674 = vmatpush.bf16.msra.mxu0 %v458
    %675 = vmatpush.bf16.msra.mxu0 %v454
    %676 = vmatpush.bf16.msra.mxu0 %v450
    %677 = vmatpush.bf16.msra.mxu0 %v446
    %678 = vmatmul.bf16.gmra.mxu0 %v630
    %v679 = vpop.f32.mrf.mxu0
    %v680 = vadd.f32 0.0, %v679
    %v681 = vpop.f32.mrf.mxu0
    %682 = vdwg.mxu0
    %v683 = vadd.f32 %v626, %v641
    %v684 = vadd.f32 %v627, %v654
    %v685 = vadd.f32 %v628, %v667
    %v686 = vadd.f32 %v629, %v680
    %v687 = vxor.u32 %v683, 2147483648
    %v688 = vxor.u32 %v684, 2147483648
    %v689 = vxor.u32 %v685, 2147483648
    %v690 = vmul.f32 %v687, 1.442695
    %v691 = vpow.pop %v690
    %v692 = vmul.f32 %v688, 1.442695
    %v693 = vpow.pop %v692
    %v694 = vmul.f32 %v689, 1.442695
    %v695 = vpow.pop %v694
    %v696 = vadd.f32 %v691, 1.0
    %v697 = vadd.f32 %v693, 1.0
    %v698 = vadd.f32 %v695, 1.0
    %v699 = vrcp.pop %v696
    %v700 = vmul.f32 %v696, %v699
    %v701 = vsub.f32 1.0, %v700
    %v702 = vmul.f32 %v699, %v701
    %v703 = vadd.f32 %v699, %v702
    %vm704 = vweird.f32 %v696
    %vm705 = vweird.f32 %v699
    %vm706 = vmor %vm704, %vm705
    %v707 = vsel %vm706, %v699, %v703
    %v708 = vand.u32 2147483647, %v696
    %vm709 = vcmp.eq.f32.partialorder %v708, 8.507059e+37
    %v710 = vand.u32 %v696, 2147483648
    %v711 = vor.u32 1.1754944e-38, %v710
    %v712 = vsel %vm709, %v711, %v707
    %v713 = vmul.f32 1.0, %v712
    %v714 = vrcp.pop %v697
    %v715 = vmul.f32 %v697, %v714
    %v716 = vsub.f32 1.0, %v715
    %v717 = vmul.f32 %v714, %v716
    %v718 = vadd.f32 %v714, %v717
    %vm719 = vweird.f32 %v697
    %vm720 = vweird.f32 %v714
    %vm721 = vmor %vm719, %vm720
    %v722 = vsel %vm721, %v714, %v718
    %v723 = vand.u32 2147483647, %v697
    %vm724 = vcmp.eq.f32.partialorder %v723, 8.507059e+37
    %v725 = vand.u32 %v697, 2147483648
    %v726 = vor.u32 1.1754944e-38, %v725
    %v727 = vsel %vm724, %v726, %v722
    %v728 = vmul.f32 1.0, %v727
    %v729 = vrcp.pop %v698
    %v730 = vmul.f32 %v698, %v729
    %v731 = vsub.f32 1.0, %v730
    %v732 = vmul.f32 %v729, %v731
    %v733 = vadd.f32 %v729, %v732
    %vm734 = vweird.f32 %v698
    %vm735 = vweird.f32 %v729
    %vm736 = vmor %vm734, %vm735
    %v737 = vsel %vm736, %v729, %v733
    %v738 = vand.u32 2147483647, %v698
    %vm739 = vcmp.eq.f32.partialorder %v738, 8.507059e+37
    %v740 = vand.u32 %v698, 2147483648
    %v741 = vor.u32 1.1754944e-38, %v740
    %v742 = vsel %vm739, %v741, %v737
    %v743 = vmul.f32 1.0, %v742
    %v744 = vtanh.pop %v686
    %v745 = vmul.f32 %v728, %v623
    %v746 = vmul.f32 %v713, %v744
    %v747 = vadd.f32 %v745, %v746
    %v748 = vtanh.pop %v747
    %v749 = vmul.f32 %v743, %v748
    %v750 = vld [vmem:[#allocation2 + $0x40] sm:$0xff]
    %v751 = vld [vmem:[#allocation2 + $0x48] sm:$0xff]
    %v752 = vld [vmem:[#allocation2 + $0x50] sm:$0xff]
    %v753 = vld [vmem:[#allocation2 + $0x58] sm:$0xff]
    %v754 = vpack.c.bf16 %v749, %v749
    %755 = vmatpush.bf16.msra.mxu0 %v471
    %756 = vmatpush.bf16.msra.mxu0 %v467
    %757 = vmatpush.bf16.msra.mxu0 %v463
    %758 = vmatpush.bf16.msra.mxu0 %v459
    %759 = vmatpush.bf16.msra.mxu0 %v455
    %760 = vmatpush.bf16.msra.mxu0 %v451
    %761 = vmatpush.bf16.msra.mxu0 %v447
    %762 = vmatpush.bf16.msra.mxu0 %v443
    %763 = vmatmul.bf16.gmra.mxu0 %v754
    %v764 = vpop.f32.mrf.mxu0
    %v765 = vadd.f32 0.0, %v764
    %v766 = vpop.f32.mrf.mxu0
    %767 = vdwg.mxu0
    %768 = vmatpush.bf16.msra.mxu0 %v472
    %769 = vmatpush.bf16.msra.mxu0 %v468
    %770 = vmatpush.bf16.msra.mxu0 %v464
    %771 = vmatpush.bf16.msra.mxu0 %v460
    %772 = vmatpush.bf16.msra.mxu0 %v456
    %773 = vmatpush.bf16.msra.mxu0 %v452
    %774 = vmatpush.bf16.msra.mxu0 %v448
    %775 = vmatpush.bf16.msra.mxu0 %v444
    %776 = vmatmul.bf16.gmra.mxu0 %v754
    %v777 = vpop.f32.mrf.mxu0
    %v778 = vadd.f32 0.0, %v777
    %v779 = vpop.f32.mrf.mxu0
    %780 = vdwg.mxu0
    %781 = vmatpush.bf16.msra.mxu0 %v473
    %782 = vmatpush.bf16.msra.mxu0 %v469
    %783 = vmatpush.bf16.msra.mxu0 %v465
    %784 = vmatpush.bf16.msra.mxu0 %v461
    %785 = vmatpush.bf16.msra.mxu0 %v457
    %786 = vmatpush.bf16.msra.mxu0 %v453
    %787 = vmatpush.bf16.msra.mxu0 %v449
    %788 = vmatpush.bf16.msra.mxu0 %v445
    %789 = vmatmul.bf16.gmra.mxu0 %v754
    %v790 = vpop.f32.mrf.mxu0
    %v791 = vadd.f32 0.0, %v790
    %v792 = vpop.f32.mrf.mxu0
    %793 = vdwg.mxu0
    %794 = vmatpush.bf16.msra.mxu0 %v474
    %795 = vmatpush.bf16.msra.mxu0 %v470
    %796 = vmatpush.bf16.msra.mxu0 %v466
    %797 = vmatpush.bf16.msra.mxu0 %v462
    %798 = vmatpush.bf16.msra.mxu0 %v458
    %799 = vmatpush.bf16.msra.mxu0 %v454
    %800 = vmatpush.bf16.msra.mxu0 %v450
    %801 = vmatpush.bf16.msra.mxu0 %v446
    %802 = vmatmul.bf16.gmra.mxu0 %v754
    %v803 = vpop.f32.mrf.mxu0
    %v804 = vadd.f32 0.0, %v803
    %v805 = vpop.f32.mrf.mxu0
    %806 = vdwg.mxu0
    %v807 = vadd.f32 %v750, %v765
    %v808 = vadd.f32 %v751, %v778
    %v809 = vadd.f32 %v752, %v791
    %v810 = vadd.f32 %v753, %v804
    %v811 = vxor.u32 %v807, 2147483648
    %v812 = vxor.u32 %v808, 2147483648
    %v813 = vxor.u32 %v809, 2147483648
    %v814 = vmul.f32 %v811, 1.442695
    %v815 = vpow.pop %v814
    %v816 = vmul.f32 %v812, 1.442695
    %v817 = vpow.pop %v816
    %v818 = vmul.f32 %v813, 1.442695
    %v819 = vpow.pop %v818
    %v820 = vadd.f32 %v815, 1.0
    %v821 = vadd.f32 %v817, 1.0
    %v822 = vadd.f32 %v819, 1.0
    %v823 = vrcp.pop %v820
    %v824 = vmul.f32 %v820, %v823
    %v825 = vsub.f32 1.0, %v824
    %v826 = vmul.f32 %v823, %v825
    %v827 = vadd.f32 %v823, %v826
    %vm828 = vweird.f32 %v820
    %vm829 = vweird.f32 %v823
    %vm830 = vmor %vm828, %vm829
    %v831 = vsel %vm830, %v823, %v827
    %v832 = vand.u32 2147483647, %v820
    %vm833 = vcmp.eq.f32.partialorder %v832, 8.507059e+37
    %v834 = vand.u32 %v820, 2147483648
    %v835 = vor.u32 1.1754944e-38, %v834
    %v836 = vsel %vm833, %v835, %v831
    %v837 = vmul.f32 1.0, %v836
    %v838 = vrcp.pop %v821
    %v839 = vmul.f32 %v821, %v838
    %v840 = vsub.f32 1.0, %v839
    %v841 = vmul.f32 %v838, %v840
    %v842 = vadd.f32 %v838, %v841
    %vm843 = vweird.f32 %v821
    %vm844 = vweird.f32 %v838
    %vm845 = vmor %vm843, %vm844
    %v846 = vsel %vm845, %v838, %v842
    %v847 = vand.u32 2147483647, %v821
    %vm848 = vcmp.eq.f32.partialorder %v847, 8.507059e+37
    %v849 = vand.u32 %v821, 2147483648
    %v850 = vor.u32 1.1754944e-38, %v849
    %v851 = vsel %vm848, %v850, %v846
    %v852 = vmul.f32 1.0, %v851
    %v853 = vrcp.pop %v822
    %v854 = vmul.f32 %v822, %v853
    %v855 = vsub.f32 1.0, %v854
    %v856 = vmul.f32 %v853, %v855
    %v857 = vadd.f32 %v853, %v856
    %vm858 = vweird.f32 %v822
    %vm859 = vweird.f32 %v853
    %vm860 = vmor %vm858, %vm859
    %v861 = vsel %vm860, %v853, %v857
    %v862 = vand.u32 2147483647, %v822
    %vm863 = vcmp.eq.f32.partialorder %v862, 8.507059e+37
    %v864 = vand.u32 %v822, 2147483648
    %v865 = vor.u32 1.1754944e-38, %v864
    %v866 = vsel %vm863, %v865, %v861
    %v867 = vmul.f32 1.0, %v866
    %v868 = vtanh.pop %v810
    %v869 = vmul.f32 %v852, %v747
    %v870 = vmul.f32 %v837, %v868
    %v871 = vadd.f32 %v869, %v870
    %v872 = vtanh.pop %v871
    %v873 = vmul.f32 %v867, %v872
    %v874 = vld [vmem:[#allocation2 + $0x60] sm:$0xff]
    %v875 = vld [vmem:[#allocation2 + $0x68] sm:$0xff]
    %v876 = vld [vmem:[#allocation2 + $0x70] sm:$0xff]
    %v877 = vld [vmem:[#allocation2 + $0x78] sm:$0xff]
    %v878 = vpack.c.bf16 %v873, %v873
    %879 = vmatpush.bf16.msra.mxu0 %v471
    %880 = vmatpush.bf16.msra.mxu0 %v467
    %881 = vmatpush.bf16.msra.mxu0 %v463
    %882 = vmatpush.bf16.msra.mxu0 %v459
    %883 = vmatpush.bf16.msra.mxu0 %v455
    %884 = vmatpush.bf16.msra.mxu0 %v451
    %885 = vmatpush.bf16.msra.mxu0 %v447
    %886 = vmatpush.bf16.msra.mxu0 %v443
    %887 = vmatmul.bf16.gmra.mxu0 %v878
    %v888 = vpop.f32.mrf.mxu0
    %v889 = vadd.f32 0.0, %v888
    %v890 = vpop.f32.mrf.mxu0
    %891 = vdwg.mxu0
    %892 = vmatpush.bf16.msra.mxu0 %v472
    %893 = vmatpush.bf16.msra.mxu0 %v468
    %894 = vmatpush.bf16.msra.mxu0 %v464
    %895 = vmatpush.bf16.msra.mxu0 %v460
    %896 = vmatpush.bf16.msra.mxu0 %v456
    %897 = vmatpush.bf16.msra.mxu0 %v452
    %898 = vmatpush.bf16.msra.mxu0 %v448
    %899 = vmatpush.bf16.msra.mxu0 %v444
    %900 = vmatmul.bf16.gmra.mxu0 %v878
    %v901 = vpop.f32.mrf.mxu0
    %v902 = vadd.f32 0.0, %v901
    %v903 = vpop.f32.mrf.mxu0
    %904 = vdwg.mxu0
    %905 = vmatpush.bf16.msra.mxu0 %v473
    %906 = vmatpush.bf16.msra.mxu0 %v469
    %907 = vmatpush.bf16.msra.mxu0 %v465
    %908 = vmatpush.bf16.msra.mxu0 %v461
    %909 = vmatpush.bf16.msra.mxu0 %v457
    %910 = vmatpush.bf16.msra.mxu0 %v453
    %911 = vmatpush.bf16.msra.mxu0 %v449
    %912 = vmatpush.bf16.msra.mxu0 %v445
    %913 = vmatmul.bf16.gmra.mxu0 %v878
    %v914 = vpop.f32.mrf.mxu0
    %v915 = vadd.f32 0.0, %v914
    %v916 = vpop.f32.mrf.mxu0
    %917 = vdwg.mxu0
    %918 = vmatpush.bf16.msra.mxu0 %v474
    %919 = vmatpush.bf16.msra.mxu0 %v470
    %920 = vmatpush.bf16.msra.mxu0 %v466
    %921 = vmatpush.bf16.msra.mxu0 %v462
    %922 = vmatpush.bf16.msra.mxu0 %v458
    %923 = vmatpush.bf16.msra.mxu0 %v454
    %924 = vmatpush.bf16.msra.mxu0 %v450
    %925 = vmatpush.bf16.msra.mxu0 %v446
    %926 = vmatmul.bf16.gmra.mxu0 %v878
    %v927 = vpop.f32.mrf.mxu0
    %v928 = vadd.f32 0.0, %v927
    %v929 = vpop.f32.mrf.mxu0
    %930 = vdwg.mxu0
    %v931 = vadd.f32 %v874, %v889
    %v932 = vadd.f32 %v875, %v902
    %v933 = vadd.f32 %v876, %v915
    %v934 = vadd.f32 %v877, %v928
    %v935 = vxor.u32 %v931, 2147483648
    %v936 = vxor.u32 %v932, 2147483648
    %v937 = vxor.u32 %v933, 2147483648
    %v938 = vmul.f32 %v935, 1.442695
    %v939 = vpow.pop %v938
    %v940 = vmul.f32 %v936, 1.442695
    %v941 = vpow.pop %v940
    %v942 = vmul.f32 %v937, 1.442695
    %v943 = vpow.pop %v942
    %v944 = vadd.f32 %v939, 1.0
    %v945 = vadd.f32 %v941, 1.0
    %v946 = vadd.f32 %v943, 1.0
    %v947 = vrcp.pop %v944
    %v948 = vmul.f32 %v944, %v947
    %v949 = vsub.f32 1.0, %v948
    %v950 = vmul.f32 %v947, %v949
    %v951 = vadd.f32 %v947, %v950
    %vm952 = vweird.f32 %v944
    %vm953 = vweird.f32 %v947
    %vm954 = vmor %vm952, %vm953
    %v955 = vsel %vm954, %v947, %v951
    %v956 = vand.u32 2147483647, %v944
    %vm957 = vcmp.eq.f32.partialorder %v956, 8.507059e+37
    %v958 = vand.u32 %v944, 2147483648
    %v959 = vor.u32 1.1754944e-38, %v958
    %v960 = vsel %vm957, %v959, %v955
    %v961 = vmul.f32 1.0, %v960
    %v962 = vrcp.pop %v945
    %v963 = vmul.f32 %v945, %v962
    %v964 = vsub.f32 1.0, %v963
    %v965 = vmul.f32 %v962, %v964
    %v966 = vadd.f32 %v962, %v965
    %vm967 = vweird.f32 %v945
    %vm968 = vweird.f32 %v962
    %vm969 = vmor %vm967, %vm968
    %v970 = vsel %vm969, %v962, %v966
    %v971 = vand.u32 2147483647, %v945
    %vm972 = vcmp.eq.f32.partialorder %v971, 8.507059e+37
    %v973 = vand.u32 %v945, 2147483648
    %v974 = vor.u32 1.1754944e-38, %v973
    %v975 = vsel %vm972, %v974, %v970
    %v976 = vmul.f32 1.0, %v975
    %v977 = vrcp.pop %v946
    %v978 = vmul.f32 %v946, %v977
    %v979 = vsub.f32 1.0, %v978
    %v980 = vmul.f32 %v977, %v979
    %v981 = vadd.f32 %v977, %v980
    %vm982 = vweird.f32 %v946
    %vm983 = vweird.f32 %v977
    %vm984 = vmor %vm982, %vm983
    %v985 = vsel %vm984, %v977, %v981
    %v986 = vand.u32 2147483647, %v946
    %vm987 = vcmp.eq.f32.partialorder %v986, 8.507059e+37
    %v988 = vand.u32 %v946, 2147483648
    %v989 = vor.u32 1.1754944e-38, %v988
    %v990 = vsel %vm987, %v989, %v985
    %v991 = vmul.f32 1.0, %v990
    %v992 = vtanh.pop %v934
    %v993 = vmul.f32 %v976, %v871
    %v994 = vmul.f32 %v961, %v992
    %v995 = vadd.f32 %v993, %v994
    %v996 = vtanh.pop %v995
    %v997 = vmul.f32 %v991, %v996
    %v998 = vld [vmem:[#allocation2 + $0x80] sm:$0xff]
    %v999 = vld [vmem:[#allocation2 + $0x88] sm:$0xff]
    %v1000 = vld [vmem:[#allocation2 + $0x90] sm:$0xff]
    %v1001 = vld [vmem:[#allocation2 + $0x98] sm:$0xff]
    %v1002 = vpack.c.bf16 %v997, %v997
    %1003 = vmatpush.bf16.msra.mxu0 %v471
    %1004 = vmatpush.bf16.msra.mxu0 %v467
    %1005 = vmatpush.bf16.msra.mxu0 %v463
    %1006 = vmatpush.bf16.msra.mxu0 %v459
    %1007 = vmatpush.bf16.msra.mxu0 %v455
    %1008 = vmatpush.bf16.msra.mxu0 %v451
    %1009 = vmatpush.bf16.msra.mxu0 %v447
    %1010 = vmatpush.bf16.msra.mxu0 %v443
    %1011 = vmatmul.bf16.gmra.mxu0 %v1002
    %v1012 = vpop.f32.mrf.mxu0
    %v1013 = vadd.f32 0.0, %v1012
    %v1014 = vpop.f32.mrf.mxu0
    %1015 = vdwg.mxu0
    %1016 = vmatpush.bf16.msra.mxu0 %v472
    %1017 = vmatpush.bf16.msra.mxu0 %v468
    %1018 = vmatpush.bf16.msra.mxu0 %v464
    %1019 = vmatpush.bf16.msra.mxu0 %v460
    %1020 = vmatpush.bf16.msra.mxu0 %v456
    %1021 = vmatpush.bf16.msra.mxu0 %v452
    %1022 = vmatpush.bf16.msra.mxu0 %v448
    %1023 = vmatpush.bf16.msra.mxu0 %v444
    %1024 = vmatmul.bf16.gmra.mxu0 %v1002
    %v1025 = vpop.f32.mrf.mxu0
    %v1026 = vadd.f32 0.0, %v1025
    %v1027 = vpop.f32.mrf.mxu0
    %1028 = vdwg.mxu0
    %1029 = vmatpush.bf16.msra.mxu0 %v473
    %1030 = vmatpush.bf16.msra.mxu0 %v469
    %1031 = vmatpush.bf16.msra.mxu0 %v465
    %1032 = vmatpush.bf16.msra.mxu0 %v461
    %1033 = vmatpush.bf16.msra.mxu0 %v457
    %1034 = vmatpush.bf16.msra.mxu0 %v453
    %1035 = vmatpush.bf16.msra.mxu0 %v449
    %1036 = vmatpush.bf16.msra.mxu0 %v445
    %1037 = vmatmul.bf16.gmra.mxu0 %v1002
    %v1038 = vpop.f32.mrf.mxu0
    %v1039 = vadd.f32 0.0, %v1038
    %v1040 = vpop.f32.mrf.mxu0
    %1041 = vdwg.mxu0
    %1042 = vmatpush.bf16.msra.mxu0 %v474
    %1043 = vmatpush.bf16.msra.mxu0 %v470
    %1044 = vmatpush.bf16.msra.mxu0 %v466
    %1045 = vmatpush.bf16.msra.mxu0 %v462
    %1046 = vmatpush.bf16.msra.mxu0 %v458
    %1047 = vmatpush.bf16.msra.mxu0 %v454
    %1048 = vmatpush.bf16.msra.mxu0 %v450
    %1049 = vmatpush.bf16.msra.mxu0 %v446
    %1050 = vmatmul.bf16.gmra.mxu0 %v1002
    %v1051 = vpop.f32.mrf.mxu0
    %v1052 = vadd.f32 0.0, %v1051
    %v1053 = vpop.f32.mrf.mxu0
    %1054 = vdwg.mxu0
    %v1055 = vadd.f32 %v998, %v1013
    %v1056 = vadd.f32 %v999, %v1026
    %v1057 = vadd.f32 %v1000, %v1039
    %v1058 = vadd.f32 %v1001, %v1052
    %v1059 = vxor.u32 %v1055, 2147483648
    %v1060 = vxor.u32 %v1056, 2147483648
    %v1061 = vxor.u32 %v1057, 2147483648
    %v1062 = vmul.f32 %v1059, 1.442695
    %v1063 = vpow.pop %v1062
    %v1064 = vmul.f32 %v1060, 1.442695
    %v1065 = vpow.pop %v1064
    %v1066 = vmul.f32 %v1061, 1.442695
    %v1067 = vpow.pop %v1066
    %v1068 = vadd.f32 %v1063, 1.0
    %v1069 = vadd.f32 %v1065, 1.0
    %v1070 = vadd.f32 %v1067, 1.0
    %v1071 = vrcp.pop %v1068
    %v1072 = vmul.f32 %v1068, %v1071
    %v1073 = vsub.f32 1.0, %v1072
    %v1074 = vmul.f32 %v1071, %v1073
    %v1075 = vadd.f32 %v1071, %v1074
    %vm1076 = vweird.f32 %v1068
    %vm1077 = vweird.f32 %v1071
    %vm1078 = vmor %vm1076, %vm1077
    %v1079 = vsel %vm1078, %v1071, %v1075
    %v1080 = vand.u32 2147483647, %v1068
    %vm1081 = vcmp.eq.f32.partialorder %v1080, 8.507059e+37
    %v1082 = vand.u32 %v1068, 2147483648
    %v1083 = vor.u32 1.1754944e-38, %v1082
    %v1084 = vsel %vm1081, %v1083, %v1079
    %v1085 = vmul.f32 1.0, %v1084
    %v1086 = vrcp.pop %v1069
    %v1087 = vmul.f32 %v1069, %v1086
    %v1088 = vsub.f32 1.0, %v1087
    %v1089 = vmul.f32 %v1086, %v1088
    %v1090 = vadd.f32 %v1086, %v1089
    %vm1091 = vweird.f32 %v1069
    %vm1092 = vweird.f32 %v1086
    %vm1093 = vmor %vm1091, %vm1092
    %v1094 = vsel %vm1093, %v1086, %v1090
    %v1095 = vand.u32 2147483647, %v1069
    %vm1096 = vcmp.eq.f32.partialorder %v1095, 8.507059e+37
    %v1097 = vand.u32 %v1069, 2147483648
    %v1098 = vor.u32 1.1754944e-38, %v1097
    %v1099 = vsel %vm1096, %v1098, %v1094
    %v1100 = vmul.f32 1.0, %v1099
    %v1101 = vrcp.pop %v1070
    %v1102 = vmul.f32 %v1070, %v1101
    %v1103 = vsub.f32 1.0, %v1102
    %v1104 = vmul.f32 %v1101, %v1103
    %v1105 = vadd.f32 %v1101, %v1104
    %vm1106 = vweird.f32 %v1070
    %vm1107 = vweird.f32 %v1101
    %vm1108 = vmor %vm1106, %vm1107
    %v1109 = vsel %vm1108, %v1101, %v1105
    %v1110 = vand.u32 2147483647, %v1070
    %vm1111 = vcmp.eq.f32.partialorder %v1110, 8.507059e+37
    %v1112 = vand.u32 %v1070, 2147483648
    %v1113 = vor.u32 1.1754944e-38, %v1112
    %v1114 = vsel %vm1111, %v1113, %v1109
    %v1115 = vmul.f32 1.0, %v1114
    %v1116 = vtanh.pop %v1058
    %v1117 = vmul.f32 %v1100, %v995
    %v1118 = vmul.f32 %v1085, %v1116
    %v1119 = vadd.f32 %v1117, %v1118
    %v1120 = vtanh.pop %v1119
    %v1121 = vmul.f32 %v1115, %v1120
    %v1122 = vld [vmem:[#allocation2 + $0xa0] sm:$0xff]
    %v1123 = vld [vmem:[#allocation2 + $0xa8] sm:$0xff]
    %v1124 = vld [vmem:[#allocation2 + $0xb0] sm:$0xff]
    %v1125 = vld [vmem:[#allocation2 + $0xb8] sm:$0xff]
    %v1126 = vpack.c.bf16 %v1121, %v1121
    %1127 = vmatpush.bf16.msra.mxu0 %v471
    %1128 = vmatpush.bf16.msra.mxu0 %v467
    %1129 = vmatpush.bf16.msra.mxu0 %v463
    %1130 = vmatpush.bf16.msra.mxu0 %v459
    %1131 = vmatpush.bf16.msra.mxu0 %v455
    %1132 = vmatpush.bf16.msra.mxu0 %v451
    %1133 = vmatpush.bf16.msra.mxu0 %v447
    %1134 = vmatpush.bf16.msra.mxu0 %v443
    %1135 = vmatmul.bf16.gmra.mxu0 %v1126
    %v1136 = vpop.f32.mrf.mxu0
    %v1137 = vadd.f32 0.0, %v1136
    %v1138 = vpop.f32.mrf.mxu0
    %1139 = vdwg.mxu0
    %1140 = vmatpush.bf16.msra.mxu0 %v472
    %1141 = vmatpush.bf16.msra.mxu0 %v468
    %1142 = vmatpush.bf16.msra.mxu0 %v464
    %1143 = vmatpush.bf16.msra.mxu0 %v460
    %1144 = vmatpush.bf16.msra.mxu0 %v456
    %1145 = vmatpush.bf16.msra.mxu0 %v452
    %1146 = vmatpush.bf16.msra.mxu0 %v448
    %1147 = vmatpush.bf16.msra.mxu0 %v444
    %1148 = vmatmul.bf16.gmra.mxu0 %v1126
    %v1149 = vpop.f32.mrf.mxu0
    %v1150 = vadd.f32 0.0, %v1149
    %v1151 = vpop.f32.mrf.mxu0
    %1152 = vdwg.mxu0
    %1153 = vmatpush.bf16.msra.mxu0 %v473
    %1154 = vmatpush.bf16.msra.mxu0 %v469
    %1155 = vmatpush.bf16.msra.mxu0 %v465
    %1156 = vmatpush.bf16.msra.mxu0 %v461
    %1157 = vmatpush.bf16.msra.mxu0 %v457
    %1158 = vmatpush.bf16.msra.mxu0 %v453
    %1159 = vmatpush.bf16.msra.mxu0 %v449
    %1160 = vmatpush.bf16.msra.mxu0 %v445
    %1161 = vmatmul.bf16.gmra.mxu0 %v1126
    %v1162 = vpop.f32.mrf.mxu0
    %v1163 = vadd.f32 0.0, %v1162
    %v1164 = vpop.f32.mrf.mxu0
    %1165 = vdwg.mxu0
    %1166 = vmatpush.bf16.msra.mxu0 %v474
    %1167 = vmatpush.bf16.msra.mxu0 %v470
    %1168 = vmatpush.bf16.msra.mxu0 %v466
    %1169 = vmatpush.bf16.msra.mxu0 %v462
    %1170 = vmatpush.bf16.msra.mxu0 %v458
    %1171 = vmatpush.bf16.msra.mxu0 %v454
    %1172 = vmatpush.bf16.msra.mxu0 %v450
    %1173 = vmatpush.bf16.msra.mxu0 %v446
    %1174 = vmatmul.bf16.gmra.mxu0 %v1126
    %v1175 = vpop.f32.mrf.mxu0
    %v1176 = vadd.f32 0.0, %v1175
    %v1177 = vpop.f32.mrf.mxu0
    %1178 = vdwg.mxu0
    %v1179 = vadd.f32 %v1122, %v1137
    %v1180 = vadd.f32 %v1123, %v1150
    %v1181 = vadd.f32 %v1124, %v1163
    %v1182 = vadd.f32 %v1125, %v1176
    %v1183 = vxor.u32 %v1179, 2147483648
    %v1184 = vxor.u32 %v1180, 2147483648
    %v1185 = vxor.u32 %v1181, 2147483648
    %v1186 = vmul.f32 %v1183, 1.442695
    %v1187 = vpow.pop %v1186
    %v1188 = vmul.f32 %v1184, 1.442695
    %v1189 = vpow.pop %v1188
    %v1190 = vmul.f32 %v1185, 1.442695
    %v1191 = vpow.pop %v1190
    %v1192 = vadd.f32 %v1187, 1.0
    %v1193 = vadd.f32 %v1189, 1.0
    %v1194 = vadd.f32 %v1191, 1.0
    %v1195 = vrcp.pop %v1192
    %v1196 = vmul.f32 %v1192, %v1195
    %v1197 = vsub.f32 1.0, %v1196
    %v1198 = vmul.f32 %v1195, %v1197
    %v1199 = vadd.f32 %v1195, %v1198
    %vm1200 = vweird.f32 %v1192
    %vm1201 = vweird.f32 %v1195
    %vm1202 = vmor %vm1200, %vm1201
    %v1203 = vsel %vm1202, %v1195, %v1199
    %v1204 = vand.u32 2147483647, %v1192
    %vm1205 = vcmp.eq.f32.partialorder %v1204, 8.507059e+37
    %v1206 = vand.u32 %v1192, 2147483648
    %v1207 = vor.u32 1.1754944e-38, %v1206
    %v1208 = vsel %vm1205, %v1207, %v1203
    %v1209 = vmul.f32 1.0, %v1208
    %v1210 = vrcp.pop %v1193
    %v1211 = vmul.f32 %v1193, %v1210
    %v1212 = vsub.f32 1.0, %v1211
    %v1213 = vmul.f32 %v1210, %v1212
    %v1214 = vadd.f32 %v1210, %v1213
    %vm1215 = vweird.f32 %v1193
    %vm1216 = vweird.f32 %v1210
    %vm1217 = vmor %vm1215, %vm1216
    %v1218 = vsel %vm1217, %v1210, %v1214
    %v1219 = vand.u32 2147483647, %v1193
    %vm1220 = vcmp.eq.f32.partialorder %v1219, 8.507059e+37
    %v1221 = vand.u32 %v1193, 2147483648
    %v1222 = vor.u32 1.1754944e-38, %v1221
    %v1223 = vsel %vm1220, %v1222, %v1218
    %v1224 = vmul.f32 1.0, %v1223
    %v1225 = vrcp.pop %v1194
    %v1226 = vmul.f32 %v1194, %v1225
    %v1227 = vsub.f32 1.0, %v1226
    %v1228 = vmul.f32 %v1225, %v1227
    %v1229 = vadd.f32 %v1225, %v1228
    %vm1230 = vweird.f32 %v1194
    %vm1231 = vweird.f32 %v1225
    %vm1232 = vmor %vm1230, %vm1231
    %v1233 = vsel %vm1232, %v1225, %v1229
    %v1234 = vand.u32 2147483647, %v1194
    %vm1235 = vcmp.eq.f32.partialorder %v1234, 8.507059e+37
    %v1236 = vand.u32 %v1194, 2147483648
    %v1237 = vor.u32 1.1754944e-38, %v1236
    %v1238 = vsel %vm1235, %v1237, %v1233
    %v1239 = vmul.f32 1.0, %v1238
    %v1240 = vtanh.pop %v1182
    %v1241 = vmul.f32 %v1224, %v1119
    %v1242 = vmul.f32 %v1209, %v1240
    %v1243 = vadd.f32 %v1241, %v1242
    %v1244 = vtanh.pop %v1243
    %v1245 = vmul.f32 %v1239, %v1244
    %v1246 = vld [vmem:[#allocation2 + $0xc0] sm:$0xff]
    %v1247 = vld [vmem:[#allocation2 + $0xc8] sm:$0xff]
    %v1248 = vld [vmem:[#allocation2 + $0xd0] sm:$0xff]
    %v1249 = vld [vmem:[#allocation2 + $0xd8] sm:$0xff]
    %v1250 = vpack.c.bf16 %v1245, %v1245
    %1251 = vmatpush.bf16.msra.mxu0 %v471
    %1252 = vmatpush.bf16.msra.mxu0 %v467
    %1253 = vmatpush.bf16.msra.mxu0 %v463
    %1254 = vmatpush.bf16.msra.mxu0 %v459
    %1255 = vmatpush.bf16.msra.mxu0 %v455
    %1256 = vmatpush.bf16.msra.mxu0 %v451
    %1257 = vmatpush.bf16.msra.mxu0 %v447
    %1258 = vmatpush.bf16.msra.mxu0 %v443
    %1259 = vmatmul.bf16.gmra.mxu0 %v1250
    %v1260 = vpop.f32.mrf.mxu0
    %v1261 = vadd.f32 0.0, %v1260
    %v1262 = vpop.f32.mrf.mxu0
    %1263 = vdwg.mxu0
    %1264 = vmatpush.bf16.msra.mxu0 %v472
    %1265 = vmatpush.bf16.msra.mxu0 %v468
    %1266 = vmatpush.bf16.msra.mxu0 %v464
    %1267 = vmatpush.bf16.msra.mxu0 %v460
    %1268 = vmatpush.bf16.msra.mxu0 %v456
    %1269 = vmatpush.bf16.msra.mxu0 %v452
    %1270 = vmatpush.bf16.msra.mxu0 %v448
    %1271 = vmatpush.bf16.msra.mxu0 %v444
    %1272 = vmatmul.bf16.gmra.mxu0 %v1250
    %v1273 = vpop.f32.mrf.mxu0
    %v1274 = vadd.f32 0.0, %v1273
    %v1275 = vpop.f32.mrf.mxu0
    %1276 = vdwg.mxu0
    %1277 = vmatpush.bf16.msra.mxu0 %v473
    %1278 = vmatpush.bf16.msra.mxu0 %v469
    %1279 = vmatpush.bf16.msra.mxu0 %v465
    %1280 = vmatpush.bf16.msra.mxu0 %v461
    %1281 = vmatpush.bf16.msra.mxu0 %v457
    %1282 = vmatpush.bf16.msra.mxu0 %v453
    %1283 = vmatpush.bf16.msra.mxu0 %v449
    %1284 = vmatpush.bf16.msra.mxu0 %v445
    %1285 = vmatmul.bf16.gmra.mxu0 %v1250
    %v1286 = vpop.f32.mrf.mxu0
    %v1287 = vadd.f32 0.0, %v1286
    %v1288 = vpop.f32.mrf.mxu0
    %1289 = vdwg.mxu0
    %1290 = vmatpush.bf16.msra.mxu0 %v474
    %1291 = vmatpush.bf16.msra.mxu0 %v470
    %1292 = vmatpush.bf16.msra.mxu0 %v466
    %1293 = vmatpush.bf16.msra.mxu0 %v462
    %1294 = vmatpush.bf16.msra.mxu0 %v458
    %1295 = vmatpush.bf16.msra.mxu0 %v454
    %1296 = vmatpush.bf16.msra.mxu0 %v450
    %1297 = vmatpush.bf16.msra.mxu0 %v446
    %1298 = vmatmul.bf16.gmra.mxu0 %v1250
    %v1299 = vpop.f32.mrf.mxu0
    %v1300 = vadd.f32 0.0, %v1299
    %v1301 = vpop.f32.mrf.mxu0
    %1302 = vdwg.mxu0
    %v1303 = vadd.f32 %v1246, %v1261
    %v1304 = vadd.f32 %v1247, %v1274
    %v1305 = vadd.f32 %v1248, %v1287
    %v1306 = vadd.f32 %v1249, %v1300
    %v1307 = vxor.u32 %v1303, 2147483648
    %v1308 = vxor.u32 %v1304, 2147483648
    %v1309 = vxor.u32 %v1305, 2147483648
    %v1310 = vmul.f32 %v1307, 1.442695
    %v1311 = vpow.pop %v1310
    %v1312 = vmul.f32 %v1308, 1.442695
    %v1313 = vpow.pop %v1312
    %v1314 = vmul.f32 %v1309, 1.442695
    %v1315 = vpow.pop %v1314
    %v1316 = vadd.f32 %v1311, 1.0
    %v1317 = vadd.f32 %v1313, 1.0
    %v1318 = vadd.f32 %v1315, 1.0
    %v1319 = vrcp.pop %v1316
    %v1320 = vmul.f32 %v1316, %v1319
    %v1321 = vsub.f32 1.0, %v1320
    %v1322 = vmul.f32 %v1319, %v1321
    %v1323 = vadd.f32 %v1319, %v1322
    %vm1324 = vweird.f32 %v1316
    %vm1325 = vweird.f32 %v1319
    %vm1326 = vmor %vm1324, %vm1325
    %v1327 = vsel %vm1326, %v1319, %v1323
    %v1328 = vand.u32 2147483647, %v1316
    %vm1329 = vcmp.eq.f32.partialorder %v1328, 8.507059e+37
    %v1330 = vand.u32 %v1316, 2147483648
    %v1331 = vor.u32 1.1754944e-38, %v1330
    %v1332 = vsel %vm1329, %v1331, %v1327
    %v1333 = vmul.f32 1.0, %v1332
    %v1334 = vrcp.pop %v1317
    %v1335 = vmul.f32 %v1317, %v1334
    %v1336 = vsub.f32 1.0, %v1335
    %v1337 = vmul.f32 %v1334, %v1336
    %v1338 = vadd.f32 %v1334, %v1337
    %vm1339 = vweird.f32 %v1317
    %vm1340 = vweird.f32 %v1334
    %vm1341 = vmor %vm1339, %vm1340
    %v1342 = vsel %vm1341, %v1334, %v1338
    %v1343 = vand.u32 2147483647, %v1317
    %vm1344 = vcmp.eq.f32.partialorder %v1343, 8.507059e+37
    %v1345 = vand.u32 %v1317, 2147483648
    %v1346 = vor.u32 1.1754944e-38, %v1345
    %v1347 = vsel %vm1344, %v1346, %v1342
    %v1348 = vmul.f32 1.0, %v1347
    %v1349 = vrcp.pop %v1318
    %v1350 = vmul.f32 %v1318, %v1349
    %v1351 = vsub.f32 1.0, %v1350
    %v1352 = vmul.f32 %v1349, %v1351
    %v1353 = vadd.f32 %v1349, %v1352
    %vm1354 = vweird.f32 %v1318
    %vm1355 = vweird.f32 %v1349
    %vm1356 = vmor %vm1354, %vm1355
    %v1357 = vsel %vm1356, %v1349, %v1353
    %v1358 = vand.u32 2147483647, %v1318
    %vm1359 = vcmp.eq.f32.partialorder %v1358, 8.507059e+37
    %v1360 = vand.u32 %v1318, 2147483648
    %v1361 = vor.u32 1.1754944e-38, %v1360
    %v1362 = vsel %vm1359, %v1361, %v1357
    %v1363 = vmul.f32 1.0, %v1362
    %v1364 = vtanh.pop %v1306
    %v1365 = vmul.f32 %v1348, %v1243
    %v1366 = vmul.f32 %v1333, %v1364
    %v1367 = vadd.f32 %v1365, %v1366
    %v1368 = vtanh.pop %v1367
    %v1369 = vmul.f32 %v1363, %v1368
    %v1370 = vld [vmem:[#allocation2 + $0xe0] sm:$0xff]
    %v1371 = vld [vmem:[#allocation2 + $0xe8] sm:$0xff]
    %v1372 = vld [vmem:[#allocation2 + $0xf0] sm:$0xff]
    %v1373 = vld [vmem:[#allocation2 + $0xf8] sm:$0xff]
    %v1374 = vpack.c.bf16 %v1369, %v1369
    %1375 = vmatpush.bf16.msra.mxu0 %v471
    %1376 = vmatpush.bf16.msra.mxu0 %v467
    %1377 = vmatpush.bf16.msra.mxu0 %v463
    %1378 = vmatpush.bf16.msra.mxu0 %v459
    %1379 = vmatpush.bf16.msra.mxu0 %v455
    %1380 = vmatpush.bf16.msra.mxu0 %v451
    %1381 = vmatpush.bf16.msra.mxu0 %v447
    %1382 = vmatpush.bf16.msra.mxu0 %v443
    %1383 = vmatmul.bf16.gmra.mxu0 %v1374
    %v1384 = vpop.f32.mrf.mxu0
    %v1385 = vadd.f32 0.0, %v1384
    %v1386 = vpop.f32.mrf.mxu0
    %1387 = vdwg.mxu0
    %1388 = vmatpush.bf16.msra.mxu0 %v472
    %1389 = vmatpush.bf16.msra.mxu0 %v468
    %1390 = vmatpush.bf16.msra.mxu0 %v464
    %1391 = vmatpush.bf16.msra.mxu0 %v460
    %1392 = vmatpush.bf16.msra.mxu0 %v456
    %1393 = vmatpush.bf16.msra.mxu0 %v452
    %1394 = vmatpush.bf16.msra.mxu0 %v448
    %1395 = vmatpush.bf16.msra.mxu0 %v444
    %1396 = vmatmul.bf16.gmra.mxu0 %v1374
    %v1397 = vpop.f32.mrf.mxu0
    %v1398 = vadd.f32 0.0, %v1397
    %v1399 = vpop.f32.mrf.mxu0
    %1400 = vdwg.mxu0
    %1401 = vmatpush.bf16.msra.mxu0 %v473
    %1402 = vmatpush.bf16.msra.mxu0 %v469
    %1403 = vmatpush.bf16.msra.mxu0 %v465
    %1404 = vmatpush.bf16.msra.mxu0 %v461
    %1405 = vmatpush.bf16.msra.mxu0 %v457
    %1406 = vmatpush.bf16.msra.mxu0 %v453
    %1407 = vmatpush.bf16.msra.mxu0 %v449
    %1408 = vmatpush.bf16.msra.mxu0 %v445
    %1409 = vmatmul.bf16.gmra.mxu0 %v1374
    %v1410 = vpop.f32.mrf.mxu0
    %v1411 = vadd.f32 0.0, %v1410
    %v1412 = vpop.f32.mrf.mxu0
    %1413 = vdwg.mxu0
    %1414 = vmatpush.bf16.msra.mxu0 %v474
    %1415 = vmatpush.bf16.msra.mxu0 %v470
    %1416 = vmatpush.bf16.msra.mxu0 %v466
    %1417 = vmatpush.bf16.msra.mxu0 %v462
    %1418 = vmatpush.bf16.msra.mxu0 %v458
    %1419 = vmatpush.bf16.msra.mxu0 %v454
    %1420 = vmatpush.bf16.msra.mxu0 %v450
    %1421 = vmatpush.bf16.msra.mxu0 %v446
    %1422 = vmatmul.bf16.gmra.mxu0 %v1374
    %v1423 = vpop.f32.mrf.mxu0
    %v1424 = vadd.f32 0.0, %v1423
    %v1425 = vpop.f32.mrf.mxu0
    %1426 = vdwg.mxu0
    %v1427 = vadd.f32 %v1370, %v1385
    %v1428 = vadd.f32 %v1371, %v1398
    %v1429 = vadd.f32 %v1372, %v1411
    %v1430 = vadd.f32 %v1373, %v1424
    %v1431 = vxor.u32 %v1427, 2147483648
    %v1432 = vxor.u32 %v1428, 2147483648
    %v1433 = vxor.u32 %v1429, 2147483648
    %v1434 = vmul.f32 %v1431, 1.442695
    %v1435 = vpow.pop %v1434
    %v1436 = vmul.f32 %v1432, 1.442695
    %v1437 = vpow.pop %v1436
    %v1438 = vmul.f32 %v1433, 1.442695
    %v1439 = vpow.pop %v1438
    %v1440 = vadd.f32 %v1435, 1.0
    %v1441 = vadd.f32 %v1437, 1.0
    %v1442 = vadd.f32 %v1439, 1.0
    %v1443 = vrcp.pop %v1440
    %v1444 = vmul.f32 %v1440, %v1443
    %v1445 = vsub.f32 1.0, %v1444
    %v1446 = vmul.f32 %v1443, %v1445
    %v1447 = vadd.f32 %v1443, %v1446
    %vm1448 = vweird.f32 %v1440
    %vm1449 = vweird.f32 %v1443
    %vm1450 = vmor %vm1448, %vm1449
    %v1451 = vsel %vm1450, %v1443, %v1447
    %v1452 = vand.u32 2147483647, %v1440
    %vm1453 = vcmp.eq.f32.partialorder %v1452, 8.507059e+37
    %v1454 = vand.u32 %v1440, 2147483648
    %v1455 = vor.u32 1.1754944e-38, %v1454
    %v1456 = vsel %vm1453, %v1455, %v1451
    %v1457 = vmul.f32 1.0, %v1456
    %v1458 = vrcp.pop %v1441
    %v1459 = vmul.f32 %v1441, %v1458
    %v1460 = vsub.f32 1.0, %v1459
    %v1461 = vmul.f32 %v1458, %v1460
    %v1462 = vadd.f32 %v1458, %v1461
    %vm1463 = vweird.f32 %v1441
    %vm1464 = vweird.f32 %v1458
    %vm1465 = vmor %vm1463, %vm1464
    %v1466 = vsel %vm1465, %v1458, %v1462
    %v1467 = vand.u32 2147483647, %v1441
    %vm1468 = vcmp.eq.f32.partialorder %v1467, 8.507059e+37
    %v1469 = vand.u32 %v1441, 2147483648
    %v1470 = vor.u32 1.1754944e-38, %v1469
    %v1471 = vsel %vm1468, %v1470, %v1466
    %v1472 = vmul.f32 1.0, %v1471
    %v1473 = vrcp.pop %v1442
    %v1474 = vmul.f32 %v1442, %v1473
    %v1475 = vsub.f32 1.0, %v1474
    %v1476 = vmul.f32 %v1473, %v1475
    %v1477 = vadd.f32 %v1473, %v1476
    %vm1478 = vweird.f32 %v1442
    %vm1479 = vweird.f32 %v1473
    %vm1480 = vmor %vm1478, %vm1479
    %v1481 = vsel %vm1480, %v1473, %v1477
    %v1482 = vand.u32 2147483647, %v1442
    %vm1483 = vcmp.eq.f32.partialorder %v1482, 8.507059e+37
    %v1484 = vand.u32 %v1442, 2147483648
    %v1485 = vor.u32 1.1754944e-38, %v1484
    %v1486 = vsel %vm1483, %v1485, %v1481
    %v1487 = vmul.f32 1.0, %v1486
    %v1488 = vtanh.pop %v1430
    %v1489 = vmul.f32 %v1472, %v1367
    %v1490 = vmul.f32 %v1457, %v1488
    %v1491 = vadd.f32 %v1489, %v1490
    %v1492 = vtanh.pop %v1491
    %v1493 = vmul.f32 %v1487, %v1492
    %1494 = vst [vmem:[%s10] sm:$0xff] %v1493
    %1495 = vst [vmem:[%s11] sm:$0xff] %v1491
    %v1496 = vpack.c.bf16 %v1493, %v1493
    %v1497 = vld [vmem:[%s6] sm:$0xf]
    %v1498 = vld [vmem:[%s6 + $0x4] sm:$0xf]
    %v1499 = vld [vmem:[%s6 + $0x8] sm:$0xf]
    %v1500 = vld [vmem:[%s6 + $0xc] sm:$0xf]
    %v1501 = vld [vmem:[%s6 + $0x10] sm:$0xf]
    %v1502 = vld [vmem:[%s6 + $0x14] sm:$0xf]
    %v1503 = vld [vmem:[%s6 + $0x18] sm:$0xf]
    %v1504 = vld [vmem:[%s6 + $0x1c] sm:$0xf]
    %v1505 = vld [vmem:[%s6 + $0x20] sm:$0xf]
    %v1506 = vld [vmem:[%s6 + $0x24] sm:$0xf]
    %v1507 = vld [vmem:[%s6 + $0x28] sm:$0xf]
    %v1508 = vld [vmem:[%s6 + $0x2c] sm:$0xf]
    %v1509 = vld [vmem:[%s6 + $0x30] sm:$0xf]
    %v1510 = vld [vmem:[%s6 + $0x34] sm:$0xf]
    %v1511 = vld [vmem:[%s6 + $0x38] sm:$0xf]
    %v1512 = vld [vmem:[%s6 + $0x3c] sm:$0xf]
    %v1513 = vld [vmem:[%s7] sm:$0x1]
    %v1515 = vperm.slane %v1513, 0
    %v1533 = vunpack.c.l.b16 %v1497
    %v1534 = vunpack.c.l.b16 %v1498
    %v1535 = vunpack.c.l.b16 %v1499
    %v1536 = vunpack.c.l.b16 %v1500
    %v1537 = vunpack.c.l.b16 %v1501
    %v1538 = vunpack.c.l.b16 %v1502
    %v1539 = vunpack.c.l.b16 %v1503
    %v1540 = vunpack.c.l.b16 %v1504
    %v1541 = vunpack.c.l.b16 %v1505
    %v1542 = vunpack.c.l.b16 %v1506
    %v1543 = vunpack.c.l.b16 %v1507
    %v1544 = vunpack.c.l.b16 %v1508
    %v1545 = vunpack.c.l.b16 %v1509
    %v1546 = vunpack.c.l.b16 %v1510
    %v1547 = vunpack.c.l.b16 %v1511
    %v1548 = vunpack.c.l.b16 %v1512
    %v1549 = vpack.c.b16 %v1534, %v1533
    %v1550 = vpack.c.b16 %v1536, %v1535
    %v1551 = vpack.c.b16 %v1538, %v1537
    %v1552 = vpack.c.b16 %v1540, %v1539
    %v1553 = vpack.c.b16 %v1542, %v1541
    %v1554 = vpack.c.b16 %v1544, %v1543
    %v1555 = vpack.c.b16 %v1546, %v1545
    %v1556 = vpack.c.b16 %v1548, %v1547
    %1565 = vmatpush.bf16.msra.mxu0 %v1556
    %1566 = vmatpush.bf16.msra.mxu0 %v1555
    %1567 = vmatpush.bf16.msra.mxu0 %v1554
    %1568 = vmatpush.bf16.msra.mxu0 %v1553
    %1569 = vmatpush.bf16.msra.mxu0 %v1552
    %1570 = vmatpush.bf16.msra.mxu0 %v1551
    %1571 = vmatpush.bf16.msra.mxu0 %v1550
    %1572 = vmatpush.bf16.msra.mxu0 %v1549
    %1573 = vmatmul.bf16.gmra.mxu0 %v1496
    %v1574 = vpop.f32.mrf.mxu0
    %v1575 = vadd.f32 %v1515, %v1574
    %v1576 = vpop.f32.mrf.mxu0
    %1577 = vdwg.mxu0
    %v1578 = vmax.f32 %v1575, 0.0
    %v1579 = vpack.c.bf16 %v1578, %v1578
    %v1580 = vld [vmem:[#allocation7] sm:$0xf]
    %v1581 = vld [vmem:[#allocation7 + $0x4] sm:$0xf]
    %v1582 = vld [vmem:[#allocation7 + $0x8] sm:$0xf]
    %v1583 = vld [vmem:[#allocation7 + $0xc] sm:$0xf]
    %v1584 = vld [vmem:[#allocation7 + $0x10] sm:$0xf]
    %v1585 = vld [vmem:[#allocation7 + $0x14] sm:$0xf]
    %v1586 = vld [vmem:[#allocation7 + $0x18] sm:$0xf]
    %v1587 = vld [vmem:[#allocation7 + $0x1c] sm:$0xf]
    %v1588 = vld [vmem:[#allocation7 + $0x20] sm:$0xf]
    %v1589 = vld [vmem:[#allocation7 + $0x24] sm:$0xf]
    %v1590 = vld [vmem:[#allocation7 + $0x28] sm:$0xf]
    %v1591 = vld [vmem:[#allocation7 + $0x2c] sm:$0xf]
    %v1592 = vld [vmem:[#allocation7 + $0x30] sm:$0xf]
    %v1593 = vld [vmem:[#allocation7 + $0x34] sm:$0xf]
    %v1594 = vld [vmem:[#allocation7 + $0x38] sm:$0xf]
    %v1595 = vld [vmem:[#allocation7 + $0x3c] sm:$0xf]
    %v1596 = vld [vmem:[%s9] sm:$0x1]
    %v1598 = vperm.slane %v1596, 0
    %v1616 = vunpack.c.l.b16 %v1580
    %v1617 = vunpack.c.l.b16 %v1581
    %v1618 = vunpack.c.l.b16 %v1582
    %v1619 = vunpack.c.l.b16 %v1583
    %v1620 = vunpack.c.l.b16 %v1584
    %v1621 = vunpack.c.l.b16 %v1585
    %v1622 = vunpack.c.l.b16 %v1586
    %v1623 = vunpack.c.l.b16 %v1587
    %v1624 = vunpack.c.l.b16 %v1588
    %v1625 = vunpack.c.l.b16 %v1589
    %v1626 = vunpack.c.l.b16 %v1590
    %v1627 = vunpack.c.l.b16 %v1591
    %v1628 = vunpack.c.l.b16 %v1592
    %v1629 = vunpack.c.l.b16 %v1593
    %v1630 = vunpack.c.l.b16 %v1594
    %v1631 = vunpack.c.l.b16 %v1595
    %v1632 = vpack.c.b16 %v1617, %v1616
    %v1633 = vpack.c.b16 %v1619, %v1618
    %v1634 = vpack.c.b16 %v1621, %v1620
    %v1635 = vpack.c.b16 %v1623, %v1622
    %v1636 = vpack.c.b16 %v1625, %v1624
    %v1637 = vpack.c.b16 %v1627, %v1626
    %v1638 = vpack.c.b16 %v1629, %v1628
    %v1639 = vpack.c.b16 %v1631, %v1630
    %1648 = vmatpush.bf16.msra.mxu0 %v1639
    %1649 = vmatpush.bf16.msra.mxu0 %v1638
    %1650 = vmatpush.bf16.msra.mxu0 %v1637
    %1651 = vmatpush.bf16.msra.mxu0 %v1636
    %1652 = vmatpush.bf16.msra.mxu0 %v1635
    %1653 = vmatpush.bf16.msra.mxu0 %v1634
    %1654 = vmatpush.bf16.msra.mxu0 %v1633
    %1655 = vmatpush.bf16.msra.mxu0 %v1632
    %1656 = vmatmul.bf16.gmra.mxu0 %v1579
    %v1657 = vpop.f32.mrf.mxu0
    %v1658 = vadd.f32 %v1598, %v1657
    %v1659 = vpop.f32.mrf.mxu0
    %1660 = vdwg.mxu0
    %v1661 = vlaneseq
    %v1662 = vand.u32 %v1661, 127
    %vm1663 = vcmp.lt.s32.totalorder %v1662, 8
    %vm1664 = vcmp.ge.s32.totalorder %v1662, 8
    %vm1665 = vcmp.lt.s32.totalorder %v1662, 24
    %vm1666 = vmand %vm1664, %vm1665
    %vm1667 = vcmp.ge.s32.totalorder %v1662, 40
    %vm1668 = vcmp.lt.s32.totalorder %v1662, 48
    %vm1669 = vmand %vm1667, %vm1668
    %vm1670 = vcmp.ge.s32.totalorder %v1662, 48
    %vm1671 = vcmp.lt.s32.totalorder %v1662, 56
    %vm1672 = vmand %vm1670, %vm1671
    %v1673 = vsel %vm1663, %v1658, -inf
    %1674 = vmax.xlane.f32.xlu0 %v1673
    %v1675 = vpop.xlane.xlu0 %1674
    %v1676 = vsub.f32 %v1658, %v1675
    %v1677 = vmul.f32 %v1676, 1.442695
    %v1678 = vpow.pop %v1677
    %v1679 = vsel %vm1663, %v1678, 0.0
    %1680 = vadd.xlane.f32.xlu0 %v1679
    %v1681 = vpop.xlane.xlu0 %1680
    %v1682 = vrcp.pop %v1681
    %v1683 = vmul.f32 %v1681, %v1682
    %v1684 = vsub.f32 1.0, %v1683
    %v1685 = vmul.f32 %v1682, %v1684
    %v1686 = vadd.f32 %v1682, %v1685
    %vm1687 = vweird.f32 %v1681
    %vm1688 = vweird.f32 %v1682
    %vm1689 = vmor %vm1687, %vm1688
    %v1690 = vsel %vm1689, %v1682, %v1686
    %v1691 = vand.u32 2147483647, %v1681
    %vm1692 = vcmp.eq.f32.partialorder %v1691, 8.507059e+37
    %v1693 = vand.u32 %v1681, 2147483648
    %v1694 = vor.u32 1.1754944e-38, %v1693
    %v1695 = vsel %vm1692, %v1694, %v1690
    %v1696 = vmul.f32 %v1679, %v1695
    %v1697 = vsel %vm1669, %v1658, -inf
    %1698 = vmax.xlane.f32.xlu0 %v1697
    %v1699 = vpop.xlane.xlu0 %1698
    %v1700 = vsub.f32 %v1658, %v1699
    %v1701 = vmul.f32 %v1700, 1.442695
    %v1702 = vpow.pop %v1701
    %v1703 = vsel %vm1669, %v1702, 0.0
    %1704 = vadd.xlane.f32.xlu0 %v1703
    %v1705 = vpop.xlane.xlu0 %1704
    %v1706 = vrcp.pop %v1705
    %v1707 = vmul.f32 %v1705, %v1706
    %v1708 = vsub.f32 1.0, %v1707
    %v1709 = vmul.f32 %v1706, %v1708
    %v1710 = vadd.f32 %v1706, %v1709
    %vm1711 = vweird.f32 %v1705
    %vm1712 = vweird.f32 %v1706
    %vm1713 = vmor %vm1711, %vm1712
    %v1714 = vsel %vm1713, %v1706, %v1710
    %v1715 = vand.u32 2147483647, %v1705
    %vm1716 = vcmp.eq.f32.partialorder %v1715, 8.507059e+37
    %v1717 = vand.u32 %v1705, 2147483648
    %v1718 = vor.u32 1.1754944e-38, %v1717
    %v1719 = vsel %vm1716, %v1718, %v1714
    %v1720 = vmul.f32 %v1703, %v1719
    %v1721 = vmul.f32 %v1658, 1.442695
    %v1722 = vpow.pop %v1721
    %v1723 = vsel %vm1666, %v1722, %v1658
    %v1724 = vadd.f32 %v1658, 1e-06
    %v1725 = vsel %vm1672, %v1724, %v1723
    %v1726 = vsel %vm1663, %v1696, %v1725
    %v1727 = vsel %vm1669, %v1720, %v1726
    %v1728 = vsel %vm1671, %v1727, 0.0
    %1729 = vst [vmem:[%s12] sm:$0xff] %v1728
    // Predicated region
    $region54: #{writer_forward.1} parent=1 // pred_check
      _
    $region55: #{writer_forward.1} parent=1 // pred_check_branch
      %1731 = sbr.rel (0) target = $region57
    $region56: #{writer_forward.1} parent=1 // pred_region
      _
    $region57: #{writer_forward.1} parent=1 // pred_fallthru
      _
    // Predicated region
    $region58: #{writer_forward.1} parent=1 // pred_check
      _
    $region59: #{writer_forward.1} parent=1 // pred_check_branch
      %1733 = sbr.rel (0) target = $region61
    $region60: #{writer_forward.1} parent=1 // pred_region
      _
    $region61: #{writer_forward.1} parent=1 // pred_fallthru
      _
    // Predicated region
    $region62: #{writer_forward.1} parent=1 // pred_check
      _
    $region63: #{writer_forward.1} parent=1 // pred_check_branch
      %1735 = sbr.rel (0) target = $region65
    $region64: #{writer_forward.1} parent=1 // pred_region
      _
    $region65: #{writer_forward.1} parent=1 // pred_fallthru
      _
    // Predicated region
    $region66: #{writer_forward.1} parent=1 // pred_check
      _
    $region67: #{writer_forward.1} parent=1 // pred_check_branch
      %1737 = sbr.rel (0) target = $region69
    $region68: #{writer_forward.1} parent=1 // pred_region
      _
    $region69: #{writer_forward.1} parent=1 // pred_fallthru
      _
    // Predicated region
    $region70: #{writer_forward.1} parent=1 // pred_check
      _
    $region71: #{writer_forward.1} parent=1 // pred_check_branch
      %1739 = sbr.rel (0) target = $region73
    $region72: #{writer_forward.1} parent=1 // pred_region
      _
    $region73: #{writer_forward.1} parent=1 // pred_fallthru
      _
    // Predicated region
    $region74: #{writer_forward.1} parent=1 // pred_check
      _
    $region75: #{writer_forward.1} parent=1 // pred_check_branch
      %1741 = sbr.rel (0) target = $region77
    $region76: #{writer_forward.1} parent=1 // pred_region
      _
    $region77: #{writer_forward.1} parent=1 // pred_fallthru
      _
    %1742 = vsyncpa [#allocation4], 1
    %1743 = vsyncpa [#allocation6], 1

</llo_original>
